<compile_context>
chip_gen: v7x
topology: tpu7x:2x2x1
jax: 0.10.0
libtpu: 0.0.40
codegen_flags: <defaults>
</compile_context>

<pallas_src>
import functools

import jax
import jax.numpy as jnp
from jax import lax
from jax.experimental import pallas as pl
from jax.experimental.pallas import tpu as pltpu

# OGB full_atom_feature_dims (get_atom_feature_dims())
FULL_ATOM_FEATURE_DIMS = (119, 5, 12, 12, 10, 6, 6, 2, 2)

_LANE = 128  # TPU lane width; one compare group spans exactly one lane tile.


def _round_up(v, m):
    return ((v + m - 1) // m) * m


def _plan_layout(dims, lane=_LANE):
    """Greedy first-fit of per-feature row ranges into 128-row lane groups.

    Returns (local_offsets, global_offsets, groups):
      local_offsets[i]  = row offset of feature i inside its lane group
                          (what the kernel compares against a [tm,128] iota),
      global_offsets[i] = group_idx*128 + local_offset (table row placement),
      groups            = tuple of tuples of feature indices per lane group.
    """
    bins_used = []
    bin_idx = []
    local_off = []
    for d in dims:
        assert d <= lane, "per-feature vocab must fit in one 128-row lane group"
        for bi, used in enumerate(bins_used):
            if used + d <= lane:
                bin_idx.append(bi)
                local_off.append(used)
                bins_used[bi] = used + d
                break
        else:
            bin_idx.append(len(bins_used))
            local_off.append(0)
            bins_used.append(d)
    n_groups = len(bins_used)
    groups = tuple(
        tuple(i for i in range(len(dims)) if bin_idx[i] == g)
        for g in range(n_groups)
    )
    global_off = tuple(
        bin_idx[i] * lane + local_off[i] for i in range(len(dims))
    )
    return tuple(local_off), global_off, groups


def atom_encoder_kernel(x_ref, table_ref, o_ref, *, groups, emb_dim,
                        compute_dtype):
    # x_ref:     [tm, F]             int32, already shifted by LOCAL offsets
    # table_ref: [n_groups*128, E_pad]  bf16/f32 (resident, fetched once)
    # o_ref:     [tm, emb_dim]       f32
    x = x_ref[...]
    tm = x.shape[0]

    # One lane-tile of column indices, reused for every group.
    col = lax.broadcasted_iota(jnp.int32, (tm, _LANE), 1)

    acc = None
    for g, feats in enumerate(groups):
        # Multi-hot over this group's 128 rows only: the per-feature row
        # ranges are disjoint, so OR the boolean one-hots and cast once.
        hot = col == x[:, feats[0]:feats[0] + 1]
        for i in feats[1:]:
            hot = jnp.logical_or(hot, col == x[:, i:i + 1])
        part = jnp.dot(
            hot.astype(compute_dtype),
            table_ref[g * _LANE:(g + 1) * _LANE, :],
            preferred_element_type=jnp.float32,
        )
        acc = part if acc is None else acc + part

    # Store exactly emb_dim lanes (masked vst if emb_dim % 128 != 0); avoids
    # writing zero lane padding and the post-kernel column slice entirely.
    o_ref[...] = acc[:, :emb_dim].astype(o_ref.dtype)


def _pick_tm(n):
    """Large atom tile, but keep >= 2 grid steps so both v7x cores get work."""
    tm = 512
    while tm > 128 and _round_up(n, tm) // tm < 2:
        tm //= 2
    return tm


def atom_encoder_pallas(x, table, local_offsets, groups, emb_dim, *, tm=None):
    """x: [N, F] int, table: [n_groups*128, E_pad] -> [N, emb_dim] f32."""
    n, f = x.shape
    t_pad, e_pad = table.shape
    compute_dtype = table.dtype

    tm = _pick_tm(n) if tm is None else _round_up(tm, 8)
    n_pad = _round_up(n, tm)

    # Shift every feature by its local (in-group) offset once, in XLA.
    x_local = x.astype(jnp.int32) + jnp.asarray(local_offsets, jnp.int32)[None, :]
    if n_pad != n:
        # Padding rows are zeros -> they select valid table rows; the
        # corresponding output rows are sliced off below.
        x_local = jnp.pad(x_local, ((0, n_pad - n), (0, 0)))

    kernel = functools.partial(
        atom_encoder_kernel,
        groups=groups,
        emb_dim=emb_dim,
        compute_dtype=compute_dtype,
    )

    cost = pl.CostEstimate(
        flops=2 * n_pad * t_pad * e_pad,
        transcendentals=0,
        bytes_accessed=(
            n_pad * f * 4
            + t_pad * e_pad * table.dtype.itemsize
            + n_pad * emb_dim * 4
        ),
    )

    out = pl.pallas_call(
        kernel,
        out_shape=jax.ShapeDtypeStruct((n_pad, emb_dim), jnp.float32),
        grid_spec=pltpu.PrefetchScalarGridSpec(
            num_scalar_prefetch=0,
            grid=(n_pad // tm,),
            in_specs=[
                # Tile over atoms; the (tiny) feature axis stays whole.
                pl.BlockSpec((tm, f), lambda i: (i, 0)),
                # Full table resident in VMEM; constant index_map -> single fetch.
                pl.BlockSpec((t_pad, e_pad), lambda i: (0, 0)),
            ],
            out_specs=pl.BlockSpec((tm, emb_dim), lambda i: (i, 0)),
        ),
        compiler_params=pltpu.CompilerParams(
            dimension_semantics=("parallel",)
        ),
        cost_estimate=cost,
    )(x_local, table)

    # Only the contiguous row slice remains (column width is already exact).
    return out[:n] if n_pad != n else out


def init_atom_encoder_params(
    key,
    emb_dim,
    dims=FULL_ATOM_FEATURE_DIMS,
    *,
    table_dtype=jnp.bfloat16,  # bf16 MXU path on all generations (v5e too)
    e_align=128,
):
    """Xavier-uniform init per feature, packed into lane groups + padded.

    Rows: each feature at group_idx*128 + local_offset (padding rows zero and
    never selected).  Columns padded to a multiple of 128 so the resident
    table is lane-aligned for the MXU; the kernel only stores emb_dim lanes.
    Note: a bf16 table quantizes the parameters; keep f32 master weights for
    training and pass a bf16 copy here.
    """
    local_offsets, global_offsets, groups = _plan_layout(dims)
    t_pad = len(groups) * _LANE
    e_pad = _round_up(emb_dim, e_align)

    keys = jax.random.split(key, len(dims))
    table = jnp.zeros((t_pad, e_pad), jnp.float32)
    for k, d, off in zip(keys, dims, global_offsets):
        bound = (6.0 / (d + emb_dim)) ** 0.5
        w = jax.random.uniform(k, (d, emb_dim), jnp.float32, -bound, bound)
        table = table.at[off:off + d, :emb_dim].set(w)
    return table.astype(table_dtype), local_offsets, global_offsets, groups


def atom_encoder_ref(x, table, global_offsets, emb_dim):
    """Pure-JAX reference matching the PyTorch forward (f32 accumulation)."""
    tab = table.astype(jnp.float32)[:, :emb_dim]
    out = 0
    for i, off in enumerate(global_offsets):
        out = out + jnp.take(tab, x[:, i] + off, axis=0)
    return out


if __name__ == "__main__":
    key = jax.random.PRNGKey(0)
    k_tab, k_x = jax.random.split(key)

    emb_dim = 32
    n_atoms = 300  # not a multiple of tm -> exercises the row-padding path
    dims = FULL_ATOM_FEATURE_DIMS

    # Integer atom features: x[:, i] in [0, dims[i])
    k_cols = jax.random.split(k_x, len(dims))
    cols = [
        jax.random.randint(kc, (n_atoms, 1), 0, d, jnp.int32)
        for kc, d in zip(k_cols, dims)
    ]
    x = jnp.concatenate(cols, axis=1)  # [N, F] int32

    # Default bf16 table: fast MXU path on v5e/v6e/v7x; 0/1 multi-hot and the
    # bf16 table values are carried exactly, matmul accumulates in f32.
    table_bf16, local_off, global_off, groups = init_atom_encoder_params(
        k_tab, emb_dim, dims, table_dtype=jnp.bfloat16
    )
    out_bf16 = atom_encoder_pallas(x, table_bf16, local_off, groups, emb_dim)
    out_bf16 = jax.block_until_ready(out_bf16)
    ref_bf16 = atom_encoder_ref(x, table_bf16, global_off, emb_dim)
    assert out_bf16.shape == (n_atoms, emb_dim)
    assert jnp.allclose(out_bf16, ref_bf16, atol=1e-3, rtol=1e-3)

    # f32 table variant (e.g. exact master weights) — same kernel.
    table_f32, local_off, global_off, groups = init_atom_encoder_params(
        k_tab, emb_dim, dims, table_dtype=jnp.float32
    )
    out_f32 = atom_encoder_pallas(x, table_f32, local_off, groups, emb_dim, tm=256)
    out_f32 = jax.block_until_ready(out_f32)
    ref_f32 = atom_encoder_ref(x, table_f32, global_off, emb_dim)
    assert jnp.allclose(out_f32, ref_f32, atol=1e-5, rtol=1e-5)

    print("KERNEL_OK")
</pallas_src>

<mosaic_0001>
module attributes {stable_mosaic.version = 11 : i64} {
  func.func @atom_encoder_kernel(%arg0: i32, %arg1: memref<256x9xi32, #tpu.memory_space<vmem>>, %arg2: memref<256x128xbf16, #tpu.memory_space<vmem>>, %arg3: memref<256x32xf32, #tpu.memory_space<vmem>>) attributes {dimension_semantics = [#tpu.dimension_semantics<parallel>], iteration_bounds = array<i64: 2>, scalar_prefetch = 0 : i64, scratch_operands = 0 : i64, tpu.core_type = #tpu.core_type<tc>, window_params = [{transform_indices = @transform_0, window_bounds = array<i64: 256, 9>}, {pipeline_mode = #tpu.pipeline_mode<synchronous>, transform_indices = @transform_1, window_bounds = array<i64: 256, 128>}, {transform_indices = @transform_2, window_bounds = array<i64: 256, 32>}]} {
    %c0 = arith.constant 0 : index
    %c0_0 = arith.constant 0 : index
    %0 = vector.load %arg1[%c0, %c0_0] : memref<256x9xi32, #tpu.memory_space<vmem>>, vector<256x9xi32>
    %1 = tpu.iota {dimensions = array<i32: 1>} : vector<256x128xi32>
    %2 = vector.extract_strided_slice %0 {offsets = [0, 0], sizes = [256, 1], strides = [1, 1]} : vector<256x9xi32> to vector<256x1xi32>
    %3 = vector.broadcast %2 : vector<256x1xi32> to vector<256x128xi32>
    %4 = arith.cmpi eq, %1, %3 : vector<256x128xi32>
    %5 = vector.extract_strided_slice %0 {offsets = [0, 1], sizes = [256, 1], strides = [1, 1]} : vector<256x9xi32> to vector<256x1xi32>
    %6 = vector.broadcast %5 : vector<256x1xi32> to vector<256x128xi32>
    %7 = arith.cmpi eq, %1, %6 : vector<256x128xi32>
    %8 = arith.ori %4, %7 : vector<256x128xi1>
    %9 = vector.extract_strided_slice %0 {offsets = [0, 7], sizes = [256, 1], strides = [1, 1]} : vector<256x9xi32> to vector<256x1xi32>
    %10 = vector.broadcast %9 : vector<256x1xi32> to vector<256x128xi32>
    %11 = arith.cmpi eq, %1, %10 : vector<256x128xi32>
    %12 = arith.ori %8, %11 : vector<256x128xi1>
    %13 = vector.extract_strided_slice %0 {offsets = [0, 8], sizes = [256, 1], strides = [1, 1]} : vector<256x9xi32> to vector<256x1xi32>
    %14 = vector.broadcast %13 : vector<256x1xi32> to vector<256x128xi32>
    %15 = arith.cmpi eq, %1, %14 : vector<256x128xi32>
    %16 = arith.ori %12, %15 : vector<256x128xi1>
    %17 = arith.extui %16 : vector<256x128xi1> to vector<256x128xi32>
    %18 = arith.sitofp %17 : vector<256x128xi32> to vector<256x128xf32>
    %19 = arith.truncf %18 : vector<256x128xf32> to vector<256x128xbf16>
    %c0_1 = arith.constant 0 : index
    %c0_2 = arith.constant 0 : index
    %20 = vector.load %arg2[%c0_1, %c0_2] : memref<256x128xbf16, #tpu.memory_space<vmem>>, vector<128x128xbf16>
    %cst = arith.constant dense<0.000000e+00> : vector<256x128xf32>
    %21 = tpu.matmul %19, %20, %cst {dimension_numbers = #tpu.dot_dimension_numbers<[1], [0], [0], [1], [0, 0, 1, 1], [], []>} : vector<256x128xbf16>, vector<128x128xbf16>, vector<256x128xf32> -> vector<256x128xf32>
    %22 = vector.extract_strided_slice %0 {offsets = [0, 2], sizes = [256, 1], strides = [1, 1]} : vector<256x9xi32> to vector<256x1xi32>
    %23 = vector.broadcast %22 : vector<256x1xi32> to vector<256x128xi32>
    %24 = arith.cmpi eq, %1, %23 : vector<256x128xi32>
    %25 = vector.extract_strided_slice %0 {offsets = [0, 3], sizes = [256, 1], strides = [1, 1]} : vector<256x9xi32> to vector<256x1xi32>
    %26 = vector.broadcast %25 : vector<256x1xi32> to vector<256x128xi32>
    %27 = arith.cmpi eq, %1, %26 : vector<256x128xi32>
    %28 = arith.ori %24, %27 : vector<256x128xi1>
    %29 = vector.extract_strided_slice %0 {offsets = [0, 4], sizes = [256, 1], strides = [1, 1]} : vector<256x9xi32> to vector<256x1xi32>
    %30 = vector.broadcast %29 : vector<256x1xi32> to vector<256x128xi32>
    %31 = arith.cmpi eq, %1, %30 : vector<256x128xi32>
    %32 = arith.ori %28, %31 : vector<256x128xi1>
    %33 = vector.extract_strided_slice %0 {offsets = [0, 5], sizes = [256, 1], strides = [1, 1]} : vector<256x9xi32> to vector<256x1xi32>
    %34 = vector.broadcast %33 : vector<256x1xi32> to vector<256x128xi32>
    %35 = arith.cmpi eq, %1, %34 : vector<256x128xi32>
    %36 = arith.ori %32, %35 : vector<256x128xi1>
    %37 = vector.extract_strided_slice %0 {offsets = [0, 6], sizes = [256, 1], strides = [1, 1]} : vector<256x9xi32> to vector<256x1xi32>
    %38 = vector.broadcast %37 : vector<256x1xi32> to vector<256x128xi32>
    %39 = arith.cmpi eq, %1, %38 : vector<256x128xi32>
    %40 = arith.ori %36, %39 : vector<256x128xi1>
    %41 = arith.extui %40 : vector<256x128xi1> to vector<256x128xi32>
    %42 = arith.sitofp %41 : vector<256x128xi32> to vector<256x128xf32>
    %43 = arith.truncf %42 : vector<256x128xf32> to vector<256x128xbf16>
    %c128 = arith.constant 128 : index
    %c0_3 = arith.constant 0 : index
    %44 = vector.load %arg2[%c128, %c0_3] : memref<256x128xbf16, #tpu.memory_space<vmem>>, vector<128x128xbf16>
    %cst_4 = arith.constant dense<0.000000e+00> : vector<256x128xf32>
    %45 = tpu.matmul %43, %44, %cst_4 {dimension_numbers = #tpu.dot_dimension_numbers<[1], [0], [0], [1], [0, 0, 1, 1], [], []>} : vector<256x128xbf16>, vector<128x128xbf16>, vector<256x128xf32> -> vector<256x128xf32>
    %46 = arith.addf %21, %45 : vector<256x128xf32>
    %47 = vector.extract_strided_slice %46 {offsets = [0, 0], sizes = [256, 32], strides = [1, 1]} : vector<256x128xf32> to vector<256x32xf32>
    %c0_5 = arith.constant 0 : index
    %c0_6 = arith.constant 0 : index
    %48 = vector.load %arg3[%c0_5, %c0_6] : memref<256x32xf32, #tpu.memory_space<vmem>>, vector<256x32xf32>
    tpu.vector_store %arg3[%c0_5, %c0_6], %47 {strides = array<i32>} : memref<256x32xf32, #tpu.memory_space<vmem>>, vector<256x32xf32>,
    return
  }
  func.func @transform_0(%arg0: i32) -> (i32, i32) {
    %c0_i32 = arith.constant 0 : i32
    %c0_i32_0 = arith.constant 0 : i32
    return %arg0, %c0_i32 : i32, i32
  }
  func.func @transform_1(%arg0: i32) -> (i32, i32) {
    %c0_i32 = arith.constant 0 : i32
    %c0_i32_0 = arith.constant 0 : i32
    %c0_i32_1 = arith.constant 0 : i32
    return %c0_i32, %c0_i32_0 : i32, i32
  }
  func.func @transform_2(%arg0: i32) -> (i32, i32) {
    %c0_i32 = arith.constant 0 : i32
    %c0_i32_0 = arith.constant 0 : i32
    return %arg0, %c0_i32 : i32, i32
  }
}

</mosaic_0001>

<llo_original>
// kernel: tpu_custom_call.1
$region0: #{tpu_custom_call.1}
  #allocation0 [shape = 'u32[]', space=smem, size = 0x4, offset = 0x4, fixed_abs, tag = 'smem constant byte address 0x4 - core index']
  #allocation1 [shape = 'u32[144,128]{1,0:T(1,128)}', space=vmem, size = 0x12000, scoped, tag = 'internal scratch']
  %s0 = inlined_call_operand.vmem [shape: s32[512,9], index: 0, kind: input, shape index: {}]
  %s1 = inlined_call_operand.vmem [shape: bf16[256,128], index: 1, kind: input, shape index: {}]
  %s2 = inlined_call_operand.vmem [shape: f32[512,32], index: 2, kind: output, shape index: {}]
  %s3 = sld [smem:[#allocation0]]
  $region41: #{tpu_custom_call.1} parent=0
    _
  %s5 = ssub.s32 1, %s3
  %s6 = scalar_select 0, %s5, %s3
  loop: start=0, step=1, limit=4
  $region2: #{tpu_custom_call.1} parent=0 // loop_pre_header
    _
  $region3: #{tpu_custom_call.1} parent=0 // loop_header
    %s8 = sphi 0, %s12
    %p9 = scmp.ge.s32.totalorder %s8, 4
    %s18 = sphi 0, %s20
    %s21 = sphi 0, %s18
    %s22 = sphi 0, %s21
    %s38 = sphi 0, %s22
    %s42 = sphi 0, %s42
    %s44 = sphi 0, %s42
    %s45 = sphi 0, %s44
    %s59 = sphi 0, %s45
    %s65 = sphi 0, %s67
    %s68 = sphi 0, %s65
    %s69 = sphi 0, %s68
    %s85 = sphi 0, %s69
  $region4: #{tpu_custom_call.1} parent=0 // loop_header_branch
    %11 = sbr.rel (%p9) target = $region8
  $region5: #{tpu_custom_call.1} parent=0 // loop_body
    %s13 = ssub.s32 %s8, 1
    %s14 = ssub.s32 %s8, 2
    %s15 = sadd.s32 %s8, 1
    %s16 = ssub.s32 %s8, %s15
    %p17 = scmp.eq.s32.totalorder %s16, 0
    %s19 = sadd.s32 %s18, 1
    %s20 = scalar_select %p17, %s18, %s19
    %p23 = pneg %p17
    %p24 = scmp.eq.s32.totalorder %s8, 1
    %p25 = por %p23, %p24
    %p26 = scmp.ne.s32.totalorder %s18, %s21
    %p27 = scmp.eq.s32.totalorder %s8, 0
    %p28 = por %p26, %p27
    %p29 = scmp.ne.s32.totalorder %s18, %s21
    %p30 = scmp.eq.s32.totalorder %s13, 1
    %p31 = por %p29, %p30
    %p32 = scmp.ne.s32.totalorder %s21, %s22
    %p33 = scmp.eq.s32.totalorder %s13, 0
    %p34 = por %p32, %p33
    %p35 = scmp.ne.s32.totalorder %s21, %s22
    %p36 = scmp.eq.s32.totalorder %s14, 1
    %p37 = por %p35, %p36
    %p39 = scmp.ne.s32.totalorder %s22, %s38
    %p40 = scmp.eq.s32.totalorder %s14, 0
    %p41 = por %p39, %p40
    %s43 = sadd.s32 %s42, 1
    %p46 = scmp.eq.s32.totalorder %s8, 1
    %p47 = scmp.ne.s32.totalorder %s42, %s44
    %p48 = scmp.eq.s32.totalorder %s8, 0
    %p49 = por %p47, %p48
    %p50 = scmp.ne.s32.totalorder %s42, %s44
    %p51 = scmp.eq.s32.totalorder %s13, 1
    %p52 = por %p50, %p51
    %p53 = scmp.ne.s32.totalorder %s44, %s45
    %p54 = scmp.eq.s32.totalorder %s13, 0
    %p55 = por %p53, %p54
    %p56 = scmp.ne.s32.totalorder %s44, %s45
    %p57 = scmp.eq.s32.totalorder %s14, 1
    %p58 = por %p56, %p57
    %p60 = scmp.ne.s32.totalorder %s45, %s59
    %p61 = scmp.eq.s32.totalorder %s14, 0
    %p62 = por %p60, %p61
    %s63 = ssub.s32 %s8, %s15
    %p64 = scmp.eq.s32.totalorder %s63, 0
    %s66 = sadd.s32 %s65, 1
    %s67 = scalar_select %p64, %s65, %s66
    %p70 = pneg %p64
    %p71 = scmp.eq.s32.totalorder %s8, 1
    %p72 = por %p70, %p71
    %p73 = scmp.ne.s32.totalorder %s65, %s68
    %p74 = scmp.eq.s32.totalorder %s8, 0
    %p75 = por %p73, %p74
    %p76 = scmp.ne.s32.totalorder %s65, %s68
    %p77 = scmp.eq.s32.totalorder %s13, 1
    %p78 = por %p76, %p77
    %p79 = scmp.ne.s32.totalorder %s68, %s69
    %p80 = scmp.eq.s32.totalorder %s13, 0
    %p81 = por %p79, %p80
    %p82 = scmp.ne.s32.totalorder %s68, %s69
    %p83 = scmp.eq.s32.totalorder %s14, 1
    %p84 = por %p82, %p83
    %p86 = scmp.ne.s32.totalorder %s69, %s85
    %p87 = scmp.eq.s32.totalorder %s14, 0
    %p88 = por %p86, %p87
    %p89 = scmp.le.s32.totalorder 1, %s8
    %p90 = scmp.lt.s32.totalorder %s8, 3
    %p91 = pnand %p89, %p90
    %p92 = pneg %p91
    // Predicated region
    $region9: #{tpu_custom_call.1} parent=5 // pred_check
      _
    $region10: #{tpu_custom_call.1} parent=5 // pred_check_branch
      %94 = sbr.rel (%p91) target = $region12
    $region11: #{tpu_custom_call.1} parent=5 // pred_region
      %s95 = ssub.s32 %s8, 1
      // Predicated region
      $region13: #{tpu_custom_call.1} parent=11 // pred_check
        %p96 = pneg %p55
      $region14: #{tpu_custom_call.1} parent=11 // pred_check_branch
        %98 = sbr.rel (%p96) target = $region16
      $region15: #{tpu_custom_call.1} parent=11 // pred_region
        _
      $region16: #{tpu_custom_call.1} parent=11 // pred_fallthru
        _
    $region12: #{tpu_custom_call.1} parent=5 // pred_fallthru
      _
    %p99 = scmp.lt.s32.totalorder %s8, 2
    // Predicated region
    $region17: #{tpu_custom_call.1} parent=5 // pred_check
      %p100 = pneg %p99
    $region18: #{tpu_custom_call.1} parent=5 // pred_check_branch
      %102 = sbr.rel (%p100) target = $region20
    $region19: #{tpu_custom_call.1} parent=5 // pred_region
      // Predicated region
      $region21: #{tpu_custom_call.1} parent=19 // pred_check
        %p103 = pneg %p28
      $region22: #{tpu_custom_call.1} parent=19 // pred_check_branch
        %105 = sbr.rel (%p103) target = $region24
      $region23: #{tpu_custom_call.1} parent=19 // pred_region
        %s106 = smul.u32 32, %s8
        %p107 = scmp.lt.s32.totalorder %s106, 63
        %s108 = scalar_select %p107, %s106, 63
        %s109 = smul.addr %s108, 8
        %s110 = scalar_lea.vmem %s0, %s109
        %s111 = smul.u32 32, %s8
      $region24: #{tpu_custom_call.1} parent=19 // pred_fallthru
        _
    $region20: #{tpu_custom_call.1} parent=5 // pred_fallthru
      _
    %p112 = scmp.le.s32.totalorder 1, %s8
    %p113 = scmp.lt.s32.totalorder %s8, 3
    %p114 = pnand %p112, %p113
    %p115 = pneg %p114
    // Predicated region
    $region25: #{tpu_custom_call.1} parent=5 // pred_check
      _
    $region26: #{tpu_custom_call.1} parent=5 // pred_check_branch
      %117 = sbr.rel (%p114) target = $region28
    $region27: #{tpu_custom_call.1} parent=5 // pred_region
      %s118 = ssub.s32 %s8, 1
      %s119 = smul.u32 32, %s13
      %p120 = scmp.lt.s32.totalorder %s119, 63
      %s121 = scalar_select %p120, %s119, 63
      %s122 = smul.addr %s121, 8
      %s123 = scalar_lea.vmem %s0, %s122
      %p124 = pneg %p34
      %p125 = pneg %p31
      %p126 = pneg %p55
      %p127 = pneg %p52
      %p128 = pneg %p81
      %p129 = pneg %p78
      %s130 = smul.u32 32, %s13
      %p131 = scmp.lt.s32.totalorder %s130, 63
      %s132 = scalar_select %p131, %s130, 63
      %s133 = smul.addr %s132, 8
      %s134 = scalar_lea.vmem %s2, %s133
      %s135 = smul.u32 32, %s13
      %p136 = scmp.lt.s32.totalorder %s135, 63
      %s137 = scalar_select %p136, %s135, 63
      %s138 = smul.addr %s137, 8
      %s139 = scalar_lea.vmem %s0, %s138
      %s140 = smul.u32 32, %s13
      %s141 = smul.u32 32, %s13
      %p142 = scmp.lt.s32.totalorder %s141, 63
      %s143 = scalar_select %p142, %s141, 63
      %s144 = smul.addr %s143, 8
      %s145 = scalar_lea.vmem %s2, %s144
      %s146 = smul.u32 32, %s13
      %v148 = vld [vmem:[%s139] sm:$0xff]
      %v149 = vld [vmem:[%s139 + $0x8] sm:$0xff]
      %v150 = vld [vmem:[%s139 + $0x10] sm:$0xff]
      %v151 = vld [vmem:[%s139 + $0x18] sm:$0xff]
      %v152 = vld [vmem:[%s139 + $0x20] sm:$0xff]
      %v153 = vld [vmem:[%s139 + $0x28] sm:$0xff]
      %v154 = vld [vmem:[%s139 + $0x30] sm:$0xff]
      %v155 = vld [vmem:[%s139 + $0x38] sm:$0xff]
      %v156 = vld [vmem:[%s139 + $0x40] sm:$0xff]
      %v157 = vld [vmem:[%s139 + $0x48] sm:$0xff]
      %v158 = vld [vmem:[%s139 + $0x50] sm:$0xff]
      %v159 = vld [vmem:[%s139 + $0x58] sm:$0xff]
      %v160 = vld [vmem:[%s139 + $0x60] sm:$0xff]
      %v161 = vld [vmem:[%s139 + $0x68] sm:$0xff]
      %v162 = vld [vmem:[%s139 + $0x70] sm:$0xff]
      %v163 = vld [vmem:[%s139 + $0x78] sm:$0xff]
      %v164 = vld [vmem:[%s139 + $0x80] sm:$0xff]
      %v165 = vld [vmem:[%s139 + $0x88] sm:$0xff]
      %v166 = vld [vmem:[%s139 + $0x90] sm:$0xff]
      %v167 = vld [vmem:[%s139 + $0x98] sm:$0xff]
      %v168 = vld [vmem:[%s139 + $0xa0] sm:$0xff]
      %v169 = vld [vmem:[%s139 + $0xa8] sm:$0xff]
      %v170 = vld [vmem:[%s139 + $0xb0] sm:$0xff]
      %v171 = vld [vmem:[%s139 + $0xb8] sm:$0xff]
      %v172 = vld [vmem:[%s139 + $0xc0] sm:$0xff]
      %v173 = vld [vmem:[%s139 + $0xc8] sm:$0xff]
      %v174 = vld [vmem:[%s139 + $0xd0] sm:$0xff]
      %v175 = vld [vmem:[%s139 + $0xd8] sm:$0xff]
      %v176 = vld [vmem:[%s139 + $0xe0] sm:$0xff]
      %v177 = vld [vmem:[%s139 + $0xe8] sm:$0xff]
      %v178 = vld [vmem:[%s139 + $0xf0] sm:$0xff]
      %v179 = vld [vmem:[%s139 + $0xf8] sm:$0xff]
      %v180 = vlaneseq
      %v181 = vand.u32 %v180, 127
      %182 = vset.pattern.permute.xlu0 0
      %183 = vperm.xlu0 %182, %v148
      %v184 = vpop.permute.xlu0 %183
      %185 = vset.pattern.permute.xlu0 0
      %186 = vperm.xlu0 %185, %v149
      %v187 = vpop.permute.xlu0 %186
      %188 = vset.pattern.permute.xlu0 0
      %189 = vperm.xlu0 %188, %v150
      %v190 = vpop.permute.xlu0 %189
      %191 = vset.pattern.permute.xlu0 0
      %192 = vperm.xlu0 %191, %v151
      %v193 = vpop.permute.xlu0 %192
      %194 = vset.pattern.permute.xlu0 0
      %195 = vperm.xlu0 %194, %v152
      %v196 = vpop.permute.xlu0 %195
      %197 = vset.pattern.permute.xlu0 0
      %198 = vperm.xlu0 %197, %v153
      %v199 = vpop.permute.xlu0 %198
      %200 = vset.pattern.permute.xlu0 0
      %201 = vperm.xlu0 %200, %v154
      %v202 = vpop.permute.xlu0 %201
      %203 = vset.pattern.permute.xlu0 0
      %204 = vperm.xlu0 %203, %v155
      %v205 = vpop.permute.xlu0 %204
      %206 = vset.pattern.permute.xlu0 0
      %207 = vperm.xlu0 %206, %v156
      %v208 = vpop.permute.xlu0 %207
      %209 = vset.pattern.permute.xlu0 0
      %210 = vperm.xlu0 %209, %v157
      %v211 = vpop.permute.xlu0 %210
      %212 = vset.pattern.permute.xlu0 0
      %213 = vperm.xlu0 %212, %v158
      %v214 = vpop.permute.xlu0 %213
      %215 = vset.pattern.permute.xlu0 0
      %216 = vperm.xlu0 %215, %v159
      %v217 = vpop.permute.xlu0 %216
      %218 = vset.pattern.permute.xlu0 0
      %219 = vperm.xlu0 %218, %v160
      %v220 = vpop.permute.xlu0 %219
      %221 = vset.pattern.permute.xlu0 0
      %222 = vperm.xlu0 %221, %v161
      %v223 = vpop.permute.xlu0 %222
      %224 = vset.pattern.permute.xlu0 0
      %225 = vperm.xlu0 %224, %v162
      %v226 = vpop.permute.xlu0 %225
      %227 = vset.pattern.permute.xlu0 0
      %228 = vperm.xlu0 %227, %v163
      %v229 = vpop.permute.xlu0 %228
      %230 = vset.pattern.permute.xlu0 0
      %231 = vperm.xlu0 %230, %v164
      %v232 = vpop.permute.xlu0 %231
      %233 = vset.pattern.permute.xlu0 0
      %234 = vperm.xlu0 %233, %v165
      %v235 = vpop.permute.xlu0 %234
      %236 = vset.pattern.permute.xlu0 0
      %237 = vperm.xlu0 %236, %v166
      %v238 = vpop.permute.xlu0 %237
      %239 = vset.pattern.permute.xlu0 0
      %240 = vperm.xlu0 %239, %v167
      %v241 = vpop.permute.xlu0 %240
      %242 = vset.pattern.permute.xlu0 0
      %243 = vperm.xlu0 %242, %v168
      %v244 = vpop.permute.xlu0 %243
      %245 = vset.pattern.permute.xlu0 0
      %246 = vperm.xlu0 %245, %v169
      %v247 = vpop.permute.xlu0 %246
      %248 = vset.pattern.permute.xlu0 0
      %249 = vperm.xlu0 %248, %v170
      %v250 = vpop.permute.xlu0 %249
      %251 = vset.pattern.permute.xlu0 0
      %252 = vperm.xlu0 %251, %v171
      %v253 = vpop.permute.xlu0 %252
      %254 = vset.pattern.permute.xlu0 0
      %255 = vperm.xlu0 %254, %v172
      %v256 = vpop.permute.xlu0 %255
      %257 = vset.pattern.permute.xlu0 0
      %258 = vperm.xlu0 %257, %v173
      %v259 = vpop.permute.xlu0 %258
      %260 = vset.pattern.permute.xlu0 0
      %261 = vperm.xlu0 %260, %v174
      %v262 = vpop.permute.xlu0 %261
      %263 = vset.pattern.permute.xlu0 0
      %264 = vperm.xlu0 %263, %v175
      %v265 = vpop.permute.xlu0 %264
      %266 = vset.pattern.permute.xlu0 0
      %267 = vperm.xlu0 %266, %v176
      %v268 = vpop.permute.xlu0 %267
      %269 = vset.pattern.permute.xlu0 0
      %270 = vperm.xlu0 %269, %v177
      %v271 = vpop.permute.xlu0 %270
      %272 = vset.pattern.permute.xlu0 0
      %273 = vperm.xlu0 %272, %v178
      %v274 = vpop.permute.xlu0 %273
      %275 = vset.pattern.permute.xlu0 0
      %276 = vperm.xlu0 %275, %v179
      %v277 = vpop.permute.xlu0 %276
      %vm278 = vcmp.eq.s32.totalorder %v181, %v184
      %vm279 = vcmp.eq.s32.totalorder %v181, %v187
      %vm280 = vcmp.eq.s32.totalorder %v181, %v190
      %vm281 = vcmp.eq.s32.totalorder %v181, %v193
      %vm282 = vcmp.eq.s32.totalorder %v181, %v196
      %vm283 = vcmp.eq.s32.totalorder %v181, %v199
      %vm284 = vcmp.eq.s32.totalorder %v181, %v202
      %vm285 = vcmp.eq.s32.totalorder %v181, %v205
      %vm286 = vcmp.eq.s32.totalorder %v181, %v208
      %vm287 = vcmp.eq.s32.totalorder %v181, %v211
      %vm288 = vcmp.eq.s32.totalorder %v181, %v214
      %vm289 = vcmp.eq.s32.totalorder %v181, %v217
      %vm290 = vcmp.eq.s32.totalorder %v181, %v220
      %vm291 = vcmp.eq.s32.totalorder %v181, %v223
      %vm292 = vcmp.eq.s32.totalorder %v181, %v226
      %vm293 = vcmp.eq.s32.totalorder %v181, %v229
      %vm294 = vcmp.eq.s32.totalorder %v181, %v232
      %vm295 = vcmp.eq.s32.totalorder %v181, %v235
      %vm296 = vcmp.eq.s32.totalorder %v181, %v238
      %vm297 = vcmp.eq.s32.totalorder %v181, %v241
      %vm298 = vcmp.eq.s32.totalorder %v181, %v244
      %vm299 = vcmp.eq.s32.totalorder %v181, %v247
      %vm300 = vcmp.eq.s32.totalorder %v181, %v250
      %vm301 = vcmp.eq.s32.totalorder %v181, %v253
      %vm302 = vcmp.eq.s32.totalorder %v181, %v256
      %vm303 = vcmp.eq.s32.totalorder %v181, %v259
      %vm304 = vcmp.eq.s32.totalorder %v181, %v262
      %vm305 = vcmp.eq.s32.totalorder %v181, %v265
      %vm306 = vcmp.eq.s32.totalorder %v181, %v268
      %vm307 = vcmp.eq.s32.totalorder %v181, %v271
      %vm308 = vcmp.eq.s32.totalorder %v181, %v274
      %vm309 = vcmp.eq.s32.totalorder %v181, %v277
      %310 = vset.pattern.permute.xlu0 1
      %311 = vperm.xlu0 %310, %v148
      %v312 = vpop.permute.xlu0 %311
      %313 = vset.pattern.permute.xlu0 1
      %314 = vperm.xlu0 %313, %v149
      %v315 = vpop.permute.xlu0 %314
      %316 = vset.pattern.permute.xlu0 1
      %317 = vperm.xlu0 %316, %v150
      %v318 = vpop.permute.xlu0 %317
      %319 = vset.pattern.permute.xlu0 1
      %320 = vperm.xlu0 %319, %v151
      %v321 = vpop.permute.xlu0 %320
      %322 = vset.pattern.permute.xlu0 1
      %323 = vperm.xlu0 %322, %v152
      %v324 = vpop.permute.xlu0 %323
      %325 = vset.pattern.permute.xlu0 1
      %326 = vperm.xlu0 %325, %v153
      %v327 = vpop.permute.xlu0 %326
      %328 = vset.pattern.permute.xlu0 1
      %329 = vperm.xlu0 %328, %v154
      %v330 = vpop.permute.xlu0 %329
      %331 = vset.pattern.permute.xlu0 1
      %332 = vperm.xlu0 %331, %v155
      %v333 = vpop.permute.xlu0 %332
      %334 = vset.pattern.permute.xlu0 1
      %335 = vperm.xlu0 %334, %v156
      %v336 = vpop.permute.xlu0 %335
      %337 = vset.pattern.permute.xlu0 1
      %338 = vperm.xlu0 %337, %v157
      %v339 = vpop.permute.xlu0 %338
      %340 = vset.pattern.permute.xlu0 1
      %341 = vperm.xlu0 %340, %v158
      %v342 = vpop.permute.xlu0 %341
      %343 = vset.pattern.permute.xlu0 1
      %344 = vperm.xlu0 %343, %v159
      %v345 = vpop.permute.xlu0 %344
      %346 = vset.pattern.permute.xlu0 1
      %347 = vperm.xlu0 %346, %v160
      %v348 = vpop.permute.xlu0 %347
      %349 = vset.pattern.permute.xlu0 1
      %350 = vperm.xlu0 %349, %v161
      %v351 = vpop.permute.xlu0 %350
      %352 = vset.pattern.permute.xlu0 1
      %353 = vperm.xlu0 %352, %v162
      %v354 = vpop.permute.xlu0 %353
      %355 = vset.pattern.permute.xlu0 1
      %356 = vperm.xlu0 %355, %v163
      %v357 = vpop.permute.xlu0 %356
      %358 = vset.pattern.permute.xlu0 1
      %359 = vperm.xlu0 %358, %v164
      %v360 = vpop.permute.xlu0 %359
      %361 = vset.pattern.permute.xlu0 1
      %362 = vperm.xlu0 %361, %v165
      %v363 = vpop.permute.xlu0 %362
      %364 = vset.pattern.permute.xlu0 1
      %365 = vperm.xlu0 %364, %v166
      %v366 = vpop.permute.xlu0 %365
      %367 = vset.pattern.permute.xlu0 1
      %368 = vperm.xlu0 %367, %v167
      %v369 = vpop.permute.xlu0 %368
      %370 = vset.pattern.permute.xlu0 1
      %371 = vperm.xlu0 %370, %v168
      %v372 = vpop.permute.xlu0 %371
      %373 = vset.pattern.permute.xlu0 1
      %374 = vperm.xlu0 %373, %v169
      %v375 = vpop.permute.xlu0 %374
      %376 = vset.pattern.permute.xlu0 1
      %377 = vperm.xlu0 %376, %v170
      %v378 = vpop.permute.xlu0 %377
      %379 = vset.pattern.permute.xlu0 1
      %380 = vperm.xlu0 %379, %v171
      %v381 = vpop.permute.xlu0 %380
      %382 = vset.pattern.permute.xlu0 1
      %383 = vperm.xlu0 %382, %v172
      %v384 = vpop.permute.xlu0 %383
      %385 = vset.pattern.permute.xlu0 1
      %386 = vperm.xlu0 %385, %v173
      %v387 = vpop.permute.xlu0 %386
      %388 = vset.pattern.permute.xlu0 1
      %389 = vperm.xlu0 %388, %v174
      %v390 = vpop.permute.xlu0 %389
      %391 = vset.pattern.permute.xlu0 1
      %392 = vperm.xlu0 %391, %v175
      %v393 = vpop.permute.xlu0 %392
      %394 = vset.pattern.permute.xlu0 1
      %395 = vperm.xlu0 %394, %v176
      %v396 = vpop.permute.xlu0 %395
      %397 = vset.pattern.permute.xlu0 1
      %398 = vperm.xlu0 %397, %v177
      %v399 = vpop.permute.xlu0 %398
      %400 = vset.pattern.permute.xlu0 1
      %401 = vperm.xlu0 %400, %v178
      %v402 = vpop.permute.xlu0 %401
      %403 = vset.pattern.permute.xlu0 1
      %404 = vperm.xlu0 %403, %v179
      %v405 = vpop.permute.xlu0 %404
      %vm406 = vcmp.eq.s32.totalorder %v181, %v312
      %vm407 = vcmp.eq.s32.totalorder %v181, %v315
      %vm408 = vcmp.eq.s32.totalorder %v181, %v318
      %vm409 = vcmp.eq.s32.totalorder %v181, %v321
      %vm410 = vcmp.eq.s32.totalorder %v181, %v324
      %vm411 = vcmp.eq.s32.totalorder %v181, %v327
      %vm412 = vcmp.eq.s32.totalorder %v181, %v330
      %vm413 = vcmp.eq.s32.totalorder %v181, %v333
      %vm414 = vcmp.eq.s32.totalorder %v181, %v336
      %vm415 = vcmp.eq.s32.totalorder %v181, %v339
      %vm416 = vcmp.eq.s32.totalorder %v181, %v342
      %vm417 = vcmp.eq.s32.totalorder %v181, %v345
      %vm418 = vcmp.eq.s32.totalorder %v181, %v348
      %vm419 = vcmp.eq.s32.totalorder %v181, %v351
      %vm420 = vcmp.eq.s32.totalorder %v181, %v354
      %vm421 = vcmp.eq.s32.totalorder %v181, %v357
      %vm422 = vcmp.eq.s32.totalorder %v181, %v360
      %vm423 = vcmp.eq.s32.totalorder %v181, %v363
      %vm424 = vcmp.eq.s32.totalorder %v181, %v366
      %vm425 = vcmp.eq.s32.totalorder %v181, %v369
      %vm426 = vcmp.eq.s32.totalorder %v181, %v372
      %vm427 = vcmp.eq.s32.totalorder %v181, %v375
      %vm428 = vcmp.eq.s32.totalorder %v181, %v378
      %vm429 = vcmp.eq.s32.totalorder %v181, %v381
      %vm430 = vcmp.eq.s32.totalorder %v181, %v384
      %vm431 = vcmp.eq.s32.totalorder %v181, %v387
      %vm432 = vcmp.eq.s32.totalorder %v181, %v390
      %vm433 = vcmp.eq.s32.totalorder %v181, %v393
      %vm434 = vcmp.eq.s32.totalorder %v181, %v396
      %vm435 = vcmp.eq.s32.totalorder %v181, %v399
      %vm436 = vcmp.eq.s32.totalorder %v181, %v402
      %vm437 = vcmp.eq.s32.totalorder %v181, %v405
      %vm438 = vmor %vm278, %vm406
      %vm439 = vmor %vm279, %vm407
      %vm440 = vmor %vm280, %vm408
      %vm441 = vmor %vm281, %vm409
      %vm442 = vmor %vm282, %vm410
      %vm443 = vmor %vm283, %vm411
      %vm444 = vmor %vm284, %vm412
      %vm445 = vmor %vm285, %vm413
      %vm446 = vmor %vm286, %vm414
      %vm447 = vmor %vm287, %vm415
      %vm448 = vmor %vm288, %vm416
      %vm449 = vmor %vm289, %vm417
      %vm450 = vmor %vm290, %vm418
      %vm451 = vmor %vm291, %vm419
      %vm452 = vmor %vm292, %vm420
      %vm453 = vmor %vm293, %vm421
      %vm454 = vmor %vm294, %vm422
      %vm455 = vmor %vm295, %vm423
      %vm456 = vmor %vm296, %vm424
      %vm457 = vmor %vm297, %vm425
      %vm458 = vmor %vm298, %vm426
      %vm459 = vmor %vm299, %vm427
      %vm460 = vmor %vm300, %vm428
      %vm461 = vmor %vm301, %vm429
      %vm462 = vmor %vm302, %vm430
      %vm463 = vmor %vm303, %vm431
      %vm464 = vmor %vm304, %vm432
      %vm465 = vmor %vm305, %vm433
      %vm466 = vmor %vm306, %vm434
      %vm467 = vmor %vm307, %vm435
      %vm468 = vmor %vm308, %vm436
      %vm469 = vmor %vm309, %vm437
      %470 = vset.pattern.permute.xlu0 7
      %471 = vperm.xlu0 %470, %v148
      %v472 = vpop.permute.xlu0 %471
      %473 = vset.pattern.permute.xlu0 7
      %474 = vperm.xlu0 %473, %v149
      %v475 = vpop.permute.xlu0 %474
      %476 = vset.pattern.permute.xlu0 7
      %477 = vperm.xlu0 %476, %v150
      %v478 = vpop.permute.xlu0 %477
      %479 = vset.pattern.permute.xlu0 7
      %480 = vperm.xlu0 %479, %v151
      %v481 = vpop.permute.xlu0 %480
      %482 = vset.pattern.permute.xlu0 7
      %483 = vperm.xlu0 %482, %v152
      %v484 = vpop.permute.xlu0 %483
      %485 = vset.pattern.permute.xlu0 7
      %486 = vperm.xlu0 %485, %v153
      %v487 = vpop.permute.xlu0 %486
      %488 = vset.pattern.permute.xlu0 7
      %489 = vperm.xlu0 %488, %v154
      %v490 = vpop.permute.xlu0 %489
      %491 = vset.pattern.permute.xlu0 7
      %492 = vperm.xlu0 %491, %v155
      %v493 = vpop.permute.xlu0 %492
      %494 = vset.pattern.permute.xlu0 7
      %495 = vperm.xlu0 %494, %v156
      %v496 = vpop.permute.xlu0 %495
      %497 = vset.pattern.permute.xlu0 7
      %498 = vperm.xlu0 %497, %v157
      %v499 = vpop.permute.xlu0 %498
      %500 = vset.pattern.permute.xlu0 7
      %501 = vperm.xlu0 %500, %v158
      %v502 = vpop.permute.xlu0 %501
      %503 = vset.pattern.permute.xlu0 7
      %504 = vperm.xlu0 %503, %v159
      %v505 = vpop.permute.xlu0 %504
      %506 = vset.pattern.permute.xlu0 7
      %507 = vperm.xlu0 %506, %v160
      %v508 = vpop.permute.xlu0 %507
      %509 = vset.pattern.permute.xlu0 7
      %510 = vperm.xlu0 %509, %v161
      %v511 = vpop.permute.xlu0 %510
      %512 = vset.pattern.permute.xlu0 7
      %513 = vperm.xlu0 %512, %v162
      %v514 = vpop.permute.xlu0 %513
      %515 = vset.pattern.permute.xlu0 7
      %516 = vperm.xlu0 %515, %v163
      %v517 = vpop.permute.xlu0 %516
      %518 = vset.pattern.permute.xlu0 7
      %519 = vperm.xlu0 %518, %v164
      %v520 = vpop.permute.xlu0 %519
      %521 = vset.pattern.permute.xlu0 7
      %522 = vperm.xlu0 %521, %v165
      %v523 = vpop.permute.xlu0 %522
      %524 = vset.pattern.permute.xlu0 7
      %525 = vperm.xlu0 %524, %v166
      %v526 = vpop.permute.xlu0 %525
      %527 = vset.pattern.permute.xlu0 7
      %528 = vperm.xlu0 %527, %v167
      %v529 = vpop.permute.xlu0 %528
      %530 = vset.pattern.permute.xlu0 7
      %531 = vperm.xlu0 %530, %v168
      %v532 = vpop.permute.xlu0 %531
      %533 = vset.pattern.permute.xlu0 7
      %534 = vperm.xlu0 %533, %v169
      %v535 = vpop.permute.xlu0 %534
      %536 = vset.pattern.permute.xlu0 7
      %537 = vperm.xlu0 %536, %v170
      %v538 = vpop.permute.xlu0 %537
      %539 = vset.pattern.permute.xlu0 7
      %540 = vperm.xlu0 %539, %v171
      %v541 = vpop.permute.xlu0 %540
      %542 = vset.pattern.permute.xlu0 7
      %543 = vperm.xlu0 %542, %v172
      %v544 = vpop.permute.xlu0 %543
      %545 = vset.pattern.permute.xlu0 7
      %546 = vperm.xlu0 %545, %v173
      %v547 = vpop.permute.xlu0 %546
      %548 = vset.pattern.permute.xlu0 7
      %549 = vperm.xlu0 %548, %v174
      %v550 = vpop.permute.xlu0 %549
      %551 = vset.pattern.permute.xlu0 7
      %552 = vperm.xlu0 %551, %v175
      %v553 = vpop.permute.xlu0 %552
      %554 = vset.pattern.permute.xlu0 7
      %555 = vperm.xlu0 %554, %v176
      %v556 = vpop.permute.xlu0 %555
      %557 = vset.pattern.permute.xlu0 7
      %558 = vperm.xlu0 %557, %v177
      %v559 = vpop.permute.xlu0 %558
      %560 = vset.pattern.permute.xlu0 7
      %561 = vperm.xlu0 %560, %v178
      %v562 = vpop.permute.xlu0 %561
      %563 = vset.pattern.permute.xlu0 7
      %564 = vperm.xlu0 %563, %v179
      %v565 = vpop.permute.xlu0 %564
      %vm566 = vcmp.eq.s32.totalorder %v181, %v472
      %vm567 = vcmp.eq.s32.totalorder %v181, %v475
      %vm568 = vcmp.eq.s32.totalorder %v181, %v478
      %vm569 = vcmp.eq.s32.totalorder %v181, %v481
      %vm570 = vcmp.eq.s32.totalorder %v181, %v484
      %vm571 = vcmp.eq.s32.totalorder %v181, %v487
      %vm572 = vcmp.eq.s32.totalorder %v181, %v490
      %vm573 = vcmp.eq.s32.totalorder %v181, %v493
      %vm574 = vcmp.eq.s32.totalorder %v181, %v496
      %vm575 = vcmp.eq.s32.totalorder %v181, %v499
      %vm576 = vcmp.eq.s32.totalorder %v181, %v502
      %vm577 = vcmp.eq.s32.totalorder %v181, %v505
      %vm578 = vcmp.eq.s32.totalorder %v181, %v508
      %vm579 = vcmp.eq.s32.totalorder %v181, %v511
      %vm580 = vcmp.eq.s32.totalorder %v181, %v514
      %vm581 = vcmp.eq.s32.totalorder %v181, %v517
      %vm582 = vcmp.eq.s32.totalorder %v181, %v520
      %vm583 = vcmp.eq.s32.totalorder %v181, %v523
      %vm584 = vcmp.eq.s32.totalorder %v181, %v526
      %vm585 = vcmp.eq.s32.totalorder %v181, %v529
      %vm586 = vcmp.eq.s32.totalorder %v181, %v532
      %vm587 = vcmp.eq.s32.totalorder %v181, %v535
      %vm588 = vcmp.eq.s32.totalorder %v181, %v538
      %vm589 = vcmp.eq.s32.totalorder %v181, %v541
      %vm590 = vcmp.eq.s32.totalorder %v181, %v544
      %vm591 = vcmp.eq.s32.totalorder %v181, %v547
      %vm592 = vcmp.eq.s32.totalorder %v181, %v550
      %vm593 = vcmp.eq.s32.totalorder %v181, %v553
      %vm594 = vcmp.eq.s32.totalorder %v181, %v556
      %vm595 = vcmp.eq.s32.totalorder %v181, %v559
      %vm596 = vcmp.eq.s32.totalorder %v181, %v562
      %vm597 = vcmp.eq.s32.totalorder %v181, %v565
      %vm598 = vmor %vm438, %vm566
      %vm599 = vmor %vm439, %vm567
      %vm600 = vmor %vm440, %vm568
      %vm601 = vmor %vm441, %vm569
      %vm602 = vmor %vm442, %vm570
      %vm603 = vmor %vm443, %vm571
      %vm604 = vmor %vm444, %vm572
      %vm605 = vmor %vm445, %vm573
      %vm606 = vmor %vm446, %vm574
      %vm607 = vmor %vm447, %vm575
      %vm608 = vmor %vm448, %vm576
      %vm609 = vmor %vm449, %vm577
      %vm610 = vmor %vm450, %vm578
      %vm611 = vmor %vm451, %vm579
      %vm612 = vmor %vm452, %vm580
      %vm613 = vmor %vm453, %vm581
      %vm614 = vmor %vm454, %vm582
      %vm615 = vmor %vm455, %vm583
      %vm616 = vmor %vm456, %vm584
      %vm617 = vmor %vm457, %vm585
      %vm618 = vmor %vm458, %vm586
      %vm619 = vmor %vm459, %vm587
      %vm620 = vmor %vm460, %vm588
      %vm621 = vmor %vm461, %vm589
      %vm622 = vmor %vm462, %vm590
      %vm623 = vmor %vm463, %vm591
      %vm624 = vmor %vm464, %vm592
      %vm625 = vmor %vm465, %vm593
      %vm626 = vmor %vm466, %vm594
      %vm627 = vmor %vm467, %vm595
      %vm628 = vmor %vm468, %vm596
      %vm629 = vmor %vm469, %vm597
      %630 = vset.pattern.permute.xlu0 8
      %631 = vperm.xlu0 %630, %v148
      %v632 = vpop.permute.xlu0 %631
      %633 = vset.pattern.permute.xlu0 8
      %634 = vperm.xlu0 %633, %v149
      %v635 = vpop.permute.xlu0 %634
      %636 = vset.pattern.permute.xlu0 8
      %637 = vperm.xlu0 %636, %v150
      %v638 = vpop.permute.xlu0 %637
      %639 = vset.pattern.permute.xlu0 8
      %640 = vperm.xlu0 %639, %v151
      %v641 = vpop.permute.xlu0 %640
      %642 = vset.pattern.permute.xlu0 8
      %643 = vperm.xlu0 %642, %v152
      %v644 = vpop.permute.xlu0 %643
      %645 = vset.pattern.permute.xlu0 8
      %646 = vperm.xlu0 %645, %v153
      %v647 = vpop.permute.xlu0 %646
      %648 = vset.pattern.permute.xlu0 8
      %649 = vperm.xlu0 %648, %v154
      %v650 = vpop.permute.xlu0 %649
      %651 = vset.pattern.permute.xlu0 8
      %652 = vperm.xlu0 %651, %v155
      %v653 = vpop.permute.xlu0 %652
      %654 = vset.pattern.permute.xlu0 8
      %655 = vperm.xlu0 %654, %v156
      %v656 = vpop.permute.xlu0 %655
      %657 = vset.pattern.permute.xlu0 8
      %658 = vperm.xlu0 %657, %v157
      %v659 = vpop.permute.xlu0 %658
      %660 = vset.pattern.permute.xlu0 8
      %661 = vperm.xlu0 %660, %v158
      %v662 = vpop.permute.xlu0 %661
      %663 = vset.pattern.permute.xlu0 8
      %664 = vperm.xlu0 %663, %v159
      %v665 = vpop.permute.xlu0 %664
      %666 = vset.pattern.permute.xlu0 8
      %667 = vperm.xlu0 %666, %v160
      %v668 = vpop.permute.xlu0 %667
      %669 = vset.pattern.permute.xlu0 8
      %670 = vperm.xlu0 %669, %v161
      %v671 = vpop.permute.xlu0 %670
      %672 = vset.pattern.permute.xlu0 8
      %673 = vperm.xlu0 %672, %v162
      %v674 = vpop.permute.xlu0 %673
      %675 = vset.pattern.permute.xlu0 8
      %676 = vperm.xlu0 %675, %v163
      %v677 = vpop.permute.xlu0 %676
      %678 = vset.pattern.permute.xlu0 8
      %679 = vperm.xlu0 %678, %v164
      %v680 = vpop.permute.xlu0 %679
      %681 = vset.pattern.permute.xlu0 8
      %682 = vperm.xlu0 %681, %v165
      %v683 = vpop.permute.xlu0 %682
      %684 = vset.pattern.permute.xlu0 8
      %685 = vperm.xlu0 %684, %v166
      %v686 = vpop.permute.xlu0 %685
      %687 = vset.pattern.permute.xlu0 8
      %688 = vperm.xlu0 %687, %v167
      %v689 = vpop.permute.xlu0 %688
      %690 = vset.pattern.permute.xlu0 8
      %691 = vperm.xlu0 %690, %v168
      %v692 = vpop.permute.xlu0 %691
      %693 = vset.pattern.permute.xlu0 8
      %694 = vperm.xlu0 %693, %v169
      %v695 = vpop.permute.xlu0 %694
      %696 = vset.pattern.permute.xlu0 8
      %697 = vperm.xlu0 %696, %v170
      %v698 = vpop.permute.xlu0 %697
      %699 = vset.pattern.permute.xlu0 8
      %700 = vperm.xlu0 %699, %v171
      %v701 = vpop.permute.xlu0 %700
      %702 = vset.pattern.permute.xlu0 8
      %703 = vperm.xlu0 %702, %v172
      %v704 = vpop.permute.xlu0 %703
      %705 = vset.pattern.permute.xlu0 8
      %706 = vperm.xlu0 %705, %v173
      %v707 = vpop.permute.xlu0 %706
      %708 = vset.pattern.permute.xlu0 8
      %709 = vperm.xlu0 %708, %v174
      %v710 = vpop.permute.xlu0 %709
      %711 = vset.pattern.permute.xlu0 8
      %712 = vperm.xlu0 %711, %v175
      %v713 = vpop.permute.xlu0 %712
      %714 = vset.pattern.permute.xlu0 8
      %715 = vperm.xlu0 %714, %v176
      %v716 = vpop.permute.xlu0 %715
      %717 = vset.pattern.permute.xlu0 8
      %718 = vperm.xlu0 %717, %v177
      %v719 = vpop.permute.xlu0 %718
      %720 = vset.pattern.permute.xlu0 8
      %721 = vperm.xlu0 %720, %v178
      %v722 = vpop.permute.xlu0 %721
      %723 = vset.pattern.permute.xlu0 8
      %724 = vperm.xlu0 %723, %v179
      %v725 = vpop.permute.xlu0 %724
      %vm726 = vcmp.eq.s32.totalorder %v181, %v632
      %vm727 = vcmp.eq.s32.totalorder %v181, %v635
      %vm728 = vcmp.eq.s32.totalorder %v181, %v638
      %vm729 = vcmp.eq.s32.totalorder %v181, %v641
      %vm730 = vcmp.eq.s32.totalorder %v181, %v644
      %vm731 = vcmp.eq.s32.totalorder %v181, %v647
      %vm732 = vcmp.eq.s32.totalorder %v181, %v650
      %vm733 = vcmp.eq.s32.totalorder %v181, %v653
      %vm734 = vcmp.eq.s32.totalorder %v181, %v656
      %vm735 = vcmp.eq.s32.totalorder %v181, %v659
      %vm736 = vcmp.eq.s32.totalorder %v181, %v662
      %vm737 = vcmp.eq.s32.totalorder %v181, %v665
      %vm738 = vcmp.eq.s32.totalorder %v181, %v668
      %vm739 = vcmp.eq.s32.totalorder %v181, %v671
      %vm740 = vcmp.eq.s32.totalorder %v181, %v674
      %vm741 = vcmp.eq.s32.totalorder %v181, %v677
      %vm742 = vcmp.eq.s32.totalorder %v181, %v680
      %vm743 = vcmp.eq.s32.totalorder %v181, %v683
      %vm744 = vcmp.eq.s32.totalorder %v181, %v686
      %vm745 = vcmp.eq.s32.totalorder %v181, %v689
      %vm746 = vcmp.eq.s32.totalorder %v181, %v692
      %vm747 = vcmp.eq.s32.totalorder %v181, %v695
      %vm748 = vcmp.eq.s32.totalorder %v181, %v698
      %vm749 = vcmp.eq.s32.totalorder %v181, %v701
      %vm750 = vcmp.eq.s32.totalorder %v181, %v704
      %vm751 = vcmp.eq.s32.totalorder %v181, %v707
      %vm752 = vcmp.eq.s32.totalorder %v181, %v710
      %vm753 = vcmp.eq.s32.totalorder %v181, %v713
      %vm754 = vcmp.eq.s32.totalorder %v181, %v716
      %vm755 = vcmp.eq.s32.totalorder %v181, %v719
      %vm756 = vcmp.eq.s32.totalorder %v181, %v722
      %vm757 = vcmp.eq.s32.totalorder %v181, %v725
      %vm758 = vmor %vm598, %vm726
      %vm759 = vmor %vm599, %vm727
      %vm760 = vmor %vm600, %vm728
      %vm761 = vmor %vm601, %vm729
      %vm762 = vmor %vm602, %vm730
      %vm763 = vmor %vm603, %vm731
      %vm764 = vmor %vm604, %vm732
      %vm765 = vmor %vm605, %vm733
      %vm766 = vmor %vm606, %vm734
      %vm767 = vmor %vm607, %vm735
      %vm768 = vmor %vm608, %vm736
      %vm769 = vmor %vm609, %vm737
      %vm770 = vmor %vm610, %vm738
      %vm771 = vmor %vm611, %vm739
      %vm772 = vmor %vm612, %vm740
      %vm773 = vmor %vm613, %vm741
      %vm774 = vmor %vm614, %vm742
      %vm775 = vmor %vm615, %vm743
      %vm776 = vmor %vm616, %vm744
      %vm777 = vmor %vm617, %vm745
      %vm778 = vmor %vm618, %vm746
      %vm779 = vmor %vm619, %vm747
      %vm780 = vmor %vm620, %vm748
      %vm781 = vmor %vm621, %vm749
      %vm782 = vmor %vm622, %vm750
      %vm783 = vmor %vm623, %vm751
      %vm784 = vmor %vm624, %vm752
      %vm785 = vmor %vm625, %vm753
      %vm786 = vmor %vm626, %vm754
      %vm787 = vmor %vm627, %vm755
      %vm788 = vmor %vm628, %vm756
      %vm789 = vmor %vm629, %vm757
      %v790 = vsel %vm758, 1, 0
      %v791 = vsel %vm759, 1, 0
      %v792 = vsel %vm760, 1, 0
      %v793 = vsel %vm761, 1, 0
      %v794 = vsel %vm762, 1, 0
      %v795 = vsel %vm763, 1, 0
      %v796 = vsel %vm764, 1, 0
      %v797 = vsel %vm765, 1, 0
      %v798 = vsel %vm766, 1, 0
      %v799 = vsel %vm767, 1, 0
      %v800 = vsel %vm768, 1, 0
      %v801 = vsel %vm769, 1, 0
      %v802 = vsel %vm770, 1, 0
      %v803 = vsel %vm771, 1, 0
      %v804 = vsel %vm772, 1, 0
      %v805 = vsel %vm773, 1, 0
      %v806 = vsel %vm774, 1, 0
      %v807 = vsel %vm775, 1, 0
      %v808 = vsel %vm776, 1, 0
      %v809 = vsel %vm777, 1, 0
      %v810 = vsel %vm778, 1, 0
      %v811 = vsel %vm779, 1, 0
      %v812 = vsel %vm780, 1, 0
      %v813 = vsel %vm781, 1, 0
      %v814 = vsel %vm782, 1, 0
      %v815 = vsel %vm783, 1, 0
      %v816 = vsel %vm784, 1, 0
      %v817 = vsel %vm785, 1, 0
      %v818 = vsel %vm786, 1, 0
      %v819 = vsel %vm787, 1, 0
      %v820 = vsel %vm788, 1, 0
      %v821 = vsel %vm789, 1, 0
      %v822 = vcvt.s32.f32 %v790
      %v823 = vcvt.s32.f32 %v791
      %v824 = vcvt.s32.f32 %v792
      %v825 = vcvt.s32.f32 %v793
      %v826 = vcvt.s32.f32 %v794
      %v827 = vcvt.s32.f32 %v795
      %v828 = vcvt.s32.f32 %v796
      %v829 = vcvt.s32.f32 %v797
      %v830 = vcvt.s32.f32 %v798
      %v831 = vcvt.s32.f32 %v799
      %v832 = vcvt.s32.f32 %v800
      %v833 = vcvt.s32.f32 %v801
      %v834 = vcvt.s32.f32 %v802
      %v835 = vcvt.s32.f32 %v803
      %v836 = vcvt.s32.f32 %v804
      %v837 = vcvt.s32.f32 %v805
      %v838 = vcvt.s32.f32 %v806
      %v839 = vcvt.s32.f32 %v807
      %v840 = vcvt.s32.f32 %v808
      %v841 = vcvt.s32.f32 %v809
      %v842 = vcvt.s32.f32 %v810
      %v843 = vcvt.s32.f32 %v811
      %v844 = vcvt.s32.f32 %v812
      %v845 = vcvt.s32.f32 %v813
      %v846 = vcvt.s32.f32 %v814
      %v847 = vcvt.s32.f32 %v815
      %v848 = vcvt.s32.f32 %v816
      %v849 = vcvt.s32.f32 %v817
      %v850 = vcvt.s32.f32 %v818
      %v851 = vcvt.s32.f32 %v819
      %v852 = vcvt.s32.f32 %v820
      %v853 = vcvt.s32.f32 %v821
      %v854 = vpack.c.bf16 %v823, %v822
      %v855 = vpack.c.bf16 %v825, %v824
      %v856 = vpack.c.bf16 %v827, %v826
      %v857 = vpack.c.bf16 %v829, %v828
      %v858 = vpack.c.bf16 %v831, %v830
      %v859 = vpack.c.bf16 %v833, %v832
      %v860 = vpack.c.bf16 %v835, %v834
      %v861 = vpack.c.bf16 %v837, %v836
      %v862 = vpack.c.bf16 %v839, %v838
      %v863 = vpack.c.bf16 %v841, %v840
      %v864 = vpack.c.bf16 %v843, %v842
      %v865 = vpack.c.bf16 %v845, %v844
      %v866 = vpack.c.bf16 %v847, %v846
      %v867 = vpack.c.bf16 %v849, %v848
      %v868 = vpack.c.bf16 %v851, %v850
      %v869 = vpack.c.bf16 %v853, %v852
      %v870 = vld [vmem:[%s1] sm:$0xf]
      %v871 = vld [vmem:[%s1 + $0x4] sm:$0xf]
      %v872 = vld [vmem:[%s1 + $0x8] sm:$0xf]
      %v873 = vld [vmem:[%s1 + $0xc] sm:$0xf]
      %v874 = vld [vmem:[%s1 + $0x10] sm:$0xf]
      %v875 = vld [vmem:[%s1 + $0x14] sm:$0xf]
      %v876 = vld [vmem:[%s1 + $0x18] sm:$0xf]
      %v877 = vld [vmem:[%s1 + $0x1c] sm:$0xf]
      %v878 = vld [vmem:[%s1 + $0x20] sm:$0xf]
      %v879 = vld [vmem:[%s1 + $0x24] sm:$0xf]
      %v880 = vld [vmem:[%s1 + $0x28] sm:$0xf]
      %v881 = vld [vmem:[%s1 + $0x2c] sm:$0xf]
      %v882 = vld [vmem:[%s1 + $0x30] sm:$0xf]
      %v883 = vld [vmem:[%s1 + $0x34] sm:$0xf]
      %v884 = vld [vmem:[%s1 + $0x38] sm:$0xf]
      %v885 = vld [vmem:[%s1 + $0x3c] sm:$0xf]
      %886 = vset.pattern.permute.xlu0 2
      %887 = vperm.xlu0 %886, %v148
      %v888 = vpop.permute.xlu0 %887
      %889 = vset.pattern.permute.xlu0 2
      %890 = vperm.xlu0 %889, %v149
      %v891 = vpop.permute.xlu0 %890
      %892 = vset.pattern.permute.xlu0 2
      %893 = vperm.xlu0 %892, %v150
      %v894 = vpop.permute.xlu0 %893
      %895 = vset.pattern.permute.xlu0 2
      %896 = vperm.xlu0 %895, %v151
      %v897 = vpop.permute.xlu0 %896
      %898 = vset.pattern.permute.xlu0 2
      %899 = vperm.xlu0 %898, %v152
      %v900 = vpop.permute.xlu0 %899
      %901 = vset.pattern.permute.xlu0 2
      %902 = vperm.xlu0 %901, %v153
      %v903 = vpop.permute.xlu0 %902
      %904 = vset.pattern.permute.xlu0 2
      %905 = vperm.xlu0 %904, %v154
      %v906 = vpop.permute.xlu0 %905
      %907 = vset.pattern.permute.xlu0 2
      %908 = vperm.xlu0 %907, %v155
      %v909 = vpop.permute.xlu0 %908
      %910 = vset.pattern.permute.xlu0 2
      %911 = vperm.xlu0 %910, %v156
      %v912 = vpop.permute.xlu0 %911
      %913 = vset.pattern.permute.xlu0 2
      %914 = vperm.xlu0 %913, %v157
      %v915 = vpop.permute.xlu0 %914
      %916 = vset.pattern.permute.xlu0 2
      %917 = vperm.xlu0 %916, %v158
      %v918 = vpop.permute.xlu0 %917
      %919 = vset.pattern.permute.xlu0 2
      %920 = vperm.xlu0 %919, %v159
      %v921 = vpop.permute.xlu0 %920
      %922 = vset.pattern.permute.xlu0 2
      %923 = vperm.xlu0 %922, %v160
      %v924 = vpop.permute.xlu0 %923
      %925 = vset.pattern.permute.xlu0 2
      %926 = vperm.xlu0 %925, %v161
      %v927 = vpop.permute.xlu0 %926
      %928 = vset.pattern.permute.xlu0 2
      %929 = vperm.xlu0 %928, %v162
      %v930 = vpop.permute.xlu0 %929
      %931 = vset.pattern.permute.xlu0 2
      %932 = vperm.xlu0 %931, %v163
      %v933 = vpop.permute.xlu0 %932
      %934 = vset.pattern.permute.xlu0 2
      %935 = vperm.xlu0 %934, %v164
      %v936 = vpop.permute.xlu0 %935
      %937 = vset.pattern.permute.xlu0 2
      %938 = vperm.xlu0 %937, %v165
      %v939 = vpop.permute.xlu0 %938
      %940 = vset.pattern.permute.xlu0 2
      %941 = vperm.xlu0 %940, %v166
      %v942 = vpop.permute.xlu0 %941
      %943 = vset.pattern.permute.xlu0 2
      %944 = vperm.xlu0 %943, %v167
      %v945 = vpop.permute.xlu0 %944
      %946 = vset.pattern.permute.xlu0 2
      %947 = vperm.xlu0 %946, %v168
      %v948 = vpop.permute.xlu0 %947
      %949 = vset.pattern.permute.xlu0 2
      %950 = vperm.xlu0 %949, %v169
      %v951 = vpop.permute.xlu0 %950
      %952 = vset.pattern.permute.xlu0 2
      %953 = vperm.xlu0 %952, %v170
      %v954 = vpop.permute.xlu0 %953
      %955 = vset.pattern.permute.xlu0 2
      %956 = vperm.xlu0 %955, %v171
      %v957 = vpop.permute.xlu0 %956
      %958 = vset.pattern.permute.xlu0 2
      %959 = vperm.xlu0 %958, %v172
      %v960 = vpop.permute.xlu0 %959
      %961 = vset.pattern.permute.xlu0 2
      %962 = vperm.xlu0 %961, %v173
      %v963 = vpop.permute.xlu0 %962
      %964 = vset.pattern.permute.xlu0 2
      %965 = vperm.xlu0 %964, %v174
      %v966 = vpop.permute.xlu0 %965
      %967 = vset.pattern.permute.xlu0 2
      %968 = vperm.xlu0 %967, %v175
      %v969 = vpop.permute.xlu0 %968
      %970 = vset.pattern.permute.xlu0 2
      %971 = vperm.xlu0 %970, %v176
      %v972 = vpop.permute.xlu0 %971
      %973 = vset.pattern.permute.xlu0 2
      %974 = vperm.xlu0 %973, %v177
      %v975 = vpop.permute.xlu0 %974
      %976 = vset.pattern.permute.xlu0 2
      %977 = vperm.xlu0 %976, %v178
      %v978 = vpop.permute.xlu0 %977
      %979 = vset.pattern.permute.xlu0 2
      %980 = vperm.xlu0 %979, %v179
      %v981 = vpop.permute.xlu0 %980
      %vm982 = vcmp.eq.s32.totalorder %v181, %v888
      %vm983 = vcmp.eq.s32.totalorder %v181, %v891
      %vm984 = vcmp.eq.s32.totalorder %v181, %v894
      %vm985 = vcmp.eq.s32.totalorder %v181, %v897
      %vm986 = vcmp.eq.s32.totalorder %v181, %v900
      %vm987 = vcmp.eq.s32.totalorder %v181, %v903
      %vm988 = vcmp.eq.s32.totalorder %v181, %v906
      %vm989 = vcmp.eq.s32.totalorder %v181, %v909
      %vm990 = vcmp.eq.s32.totalorder %v181, %v912
      %vm991 = vcmp.eq.s32.totalorder %v181, %v915
      %vm992 = vcmp.eq.s32.totalorder %v181, %v918
      %vm993 = vcmp.eq.s32.totalorder %v181, %v921
      %vm994 = vcmp.eq.s32.totalorder %v181, %v924
      %vm995 = vcmp.eq.s32.totalorder %v181, %v927
      %vm996 = vcmp.eq.s32.totalorder %v181, %v930
      %vm997 = vcmp.eq.s32.totalorder %v181, %v933
      %vm998 = vcmp.eq.s32.totalorder %v181, %v936
      %vm999 = vcmp.eq.s32.totalorder %v181, %v939
      %vm1000 = vcmp.eq.s32.totalorder %v181, %v942
      %vm1001 = vcmp.eq.s32.totalorder %v181, %v945
      %vm1002 = vcmp.eq.s32.totalorder %v181, %v948
      %vm1003 = vcmp.eq.s32.totalorder %v181, %v951
      %vm1004 = vcmp.eq.s32.totalorder %v181, %v954
      %vm1005 = vcmp.eq.s32.totalorder %v181, %v957
      %vm1006 = vcmp.eq.s32.totalorder %v181, %v960
      %vm1007 = vcmp.eq.s32.totalorder %v181, %v963
      %vm1008 = vcmp.eq.s32.totalorder %v181, %v966
      %vm1009 = vcmp.eq.s32.totalorder %v181, %v969
      %vm1010 = vcmp.eq.s32.totalorder %v181, %v972
      %vm1011 = vcmp.eq.s32.totalorder %v181, %v975
      %vm1012 = vcmp.eq.s32.totalorder %v181, %v978
      %vm1013 = vcmp.eq.s32.totalorder %v181, %v981
      %1014 = vset.pattern.permute.xlu0 3
      %1015 = vperm.xlu0 %1014, %v148
      %v1016 = vpop.permute.xlu0 %1015
      %1017 = vset.pattern.permute.xlu0 3
      %1018 = vperm.xlu0 %1017, %v149
      %v1019 = vpop.permute.xlu0 %1018
      %1020 = vset.pattern.permute.xlu0 3
      %1021 = vperm.xlu0 %1020, %v150
      %v1022 = vpop.permute.xlu0 %1021
      %1023 = vset.pattern.permute.xlu0 3
      %1024 = vperm.xlu0 %1023, %v151
      %v1025 = vpop.permute.xlu0 %1024
      %1026 = vset.pattern.permute.xlu0 3
      %1027 = vperm.xlu0 %1026, %v152
      %v1028 = vpop.permute.xlu0 %1027
      %1029 = vset.pattern.permute.xlu0 3
      %1030 = vperm.xlu0 %1029, %v153
      %v1031 = vpop.permute.xlu0 %1030
      %1032 = vset.pattern.permute.xlu0 3
      %1033 = vperm.xlu0 %1032, %v154
      %v1034 = vpop.permute.xlu0 %1033
      %1035 = vset.pattern.permute.xlu0 3
      %1036 = vperm.xlu0 %1035, %v155
      %v1037 = vpop.permute.xlu0 %1036
      %1038 = vset.pattern.permute.xlu0 3
      %1039 = vperm.xlu0 %1038, %v156
      %v1040 = vpop.permute.xlu0 %1039
      %1041 = vset.pattern.permute.xlu0 3
      %1042 = vperm.xlu0 %1041, %v157
      %v1043 = vpop.permute.xlu0 %1042
      %1044 = vset.pattern.permute.xlu0 3
      %1045 = vperm.xlu0 %1044, %v158
      %v1046 = vpop.permute.xlu0 %1045
      %1047 = vset.pattern.permute.xlu0 3
      %1048 = vperm.xlu0 %1047, %v159
      %v1049 = vpop.permute.xlu0 %1048
      %1050 = vset.pattern.permute.xlu0 3
      %1051 = vperm.xlu0 %1050, %v160
      %v1052 = vpop.permute.xlu0 %1051
      %1053 = vset.pattern.permute.xlu0 3
      %1054 = vperm.xlu0 %1053, %v161
      %v1055 = vpop.permute.xlu0 %1054
      %1056 = vset.pattern.permute.xlu0 3
      %1057 = vperm.xlu0 %1056, %v162
      %v1058 = vpop.permute.xlu0 %1057
      %1059 = vset.pattern.permute.xlu0 3
      %1060 = vperm.xlu0 %1059, %v163
      %v1061 = vpop.permute.xlu0 %1060
      %1062 = vset.pattern.permute.xlu0 3
      %1063 = vperm.xlu0 %1062, %v164
      %v1064 = vpop.permute.xlu0 %1063
      %1065 = vset.pattern.permute.xlu0 3
      %1066 = vperm.xlu0 %1065, %v165
      %v1067 = vpop.permute.xlu0 %1066
      %1068 = vset.pattern.permute.xlu0 3
      %1069 = vperm.xlu0 %1068, %v166
      %v1070 = vpop.permute.xlu0 %1069
      %1071 = vset.pattern.permute.xlu0 3
      %1072 = vperm.xlu0 %1071, %v167
      %v1073 = vpop.permute.xlu0 %1072
      %1074 = vset.pattern.permute.xlu0 3
      %1075 = vperm.xlu0 %1074, %v168
      %v1076 = vpop.permute.xlu0 %1075
      %1077 = vset.pattern.permute.xlu0 3
      %1078 = vperm.xlu0 %1077, %v169
      %v1079 = vpop.permute.xlu0 %1078
      %1080 = vset.pattern.permute.xlu0 3
      %1081 = vperm.xlu0 %1080, %v170
      %v1082 = vpop.permute.xlu0 %1081
      %1083 = vset.pattern.permute.xlu0 3
      %1084 = vperm.xlu0 %1083, %v171
      %v1085 = vpop.permute.xlu0 %1084
      %1086 = vset.pattern.permute.xlu0 3
      %1087 = vperm.xlu0 %1086, %v172
      %v1088 = vpop.permute.xlu0 %1087
      %1089 = vset.pattern.permute.xlu0 3
      %1090 = vperm.xlu0 %1089, %v173
      %v1091 = vpop.permute.xlu0 %1090
      %1092 = vset.pattern.permute.xlu0 3
      %1093 = vperm.xlu0 %1092, %v174
      %v1094 = vpop.permute.xlu0 %1093
      %1095 = vset.pattern.permute.xlu0 3
      %1096 = vperm.xlu0 %1095, %v175
      %v1097 = vpop.permute.xlu0 %1096
      %1098 = vset.pattern.permute.xlu0 3
      %1099 = vperm.xlu0 %1098, %v176
      %v1100 = vpop.permute.xlu0 %1099
      %1101 = vset.pattern.permute.xlu0 3
      %1102 = vperm.xlu0 %1101, %v177
      %v1103 = vpop.permute.xlu0 %1102
      %1104 = vset.pattern.permute.xlu0 3
      %1105 = vperm.xlu0 %1104, %v178
      %v1106 = vpop.permute.xlu0 %1105
      %1107 = vset.pattern.permute.xlu0 3
      %1108 = vperm.xlu0 %1107, %v179
      %v1109 = vpop.permute.xlu0 %1108
      %vm1110 = vcmp.eq.s32.totalorder %v181, %v1016
      %vm1111 = vcmp.eq.s32.totalorder %v181, %v1019
      %vm1112 = vcmp.eq.s32.totalorder %v181, %v1022
      %vm1113 = vcmp.eq.s32.totalorder %v181, %v1025
      %vm1114 = vcmp.eq.s32.totalorder %v181, %v1028
      %vm1115 = vcmp.eq.s32.totalorder %v181, %v1031
      %vm1116 = vcmp.eq.s32.totalorder %v181, %v1034
      %vm1117 = vcmp.eq.s32.totalorder %v181, %v1037
      %vm1118 = vcmp.eq.s32.totalorder %v181, %v1040
      %vm1119 = vcmp.eq.s32.totalorder %v181, %v1043
      %vm1120 = vcmp.eq.s32.totalorder %v181, %v1046
      %vm1121 = vcmp.eq.s32.totalorder %v181, %v1049
      %vm1122 = vcmp.eq.s32.totalorder %v181, %v1052
      %vm1123 = vcmp.eq.s32.totalorder %v181, %v1055
      %vm1124 = vcmp.eq.s32.totalorder %v181, %v1058
      %vm1125 = vcmp.eq.s32.totalorder %v181, %v1061
      %vm1126 = vcmp.eq.s32.totalorder %v181, %v1064
      %vm1127 = vcmp.eq.s32.totalorder %v181, %v1067
      %vm1128 = vcmp.eq.s32.totalorder %v181, %v1070
      %vm1129 = vcmp.eq.s32.totalorder %v181, %v1073
      %vm1130 = vcmp.eq.s32.totalorder %v181, %v1076
      %vm1131 = vcmp.eq.s32.totalorder %v181, %v1079
      %vm1132 = vcmp.eq.s32.totalorder %v181, %v1082
      %vm1133 = vcmp.eq.s32.totalorder %v181, %v1085
      %vm1134 = vcmp.eq.s32.totalorder %v181, %v1088
      %vm1135 = vcmp.eq.s32.totalorder %v181, %v1091
      %vm1136 = vcmp.eq.s32.totalorder %v181, %v1094
      %vm1137 = vcmp.eq.s32.totalorder %v181, %v1097
      %vm1138 = vcmp.eq.s32.totalorder %v181, %v1100
      %vm1139 = vcmp.eq.s32.totalorder %v181, %v1103
      %vm1140 = vcmp.eq.s32.totalorder %v181, %v1106
      %vm1141 = vcmp.eq.s32.totalorder %v181, %v1109
      %vm1142 = vmor %vm982, %vm1110
      %vm1143 = vmor %vm983, %vm1111
      %vm1144 = vmor %vm984, %vm1112
      %vm1145 = vmor %vm985, %vm1113
      %vm1146 = vmor %vm986, %vm1114
      %vm1147 = vmor %vm987, %vm1115
      %vm1148 = vmor %vm988, %vm1116
      %vm1149 = vmor %vm989, %vm1117
      %vm1150 = vmor %vm990, %vm1118
      %vm1151 = vmor %vm991, %vm1119
      %vm1152 = vmor %vm992, %vm1120
      %vm1153 = vmor %vm993, %vm1121
      %vm1154 = vmor %vm994, %vm1122
      %vm1155 = vmor %vm995, %vm1123
      %vm1156 = vmor %vm996, %vm1124
      %vm1157 = vmor %vm997, %vm1125
      %vm1158 = vmor %vm998, %vm1126
      %vm1159 = vmor %vm999, %vm1127
      %vm1160 = vmor %vm1000, %vm1128
      %vm1161 = vmor %vm1001, %vm1129
      %vm1162 = vmor %vm1002, %vm1130
      %vm1163 = vmor %vm1003, %vm1131
      %vm1164 = vmor %vm1004, %vm1132
      %vm1165 = vmor %vm1005, %vm1133
      %vm1166 = vmor %vm1006, %vm1134
      %vm1167 = vmor %vm1007, %vm1135
      %vm1168 = vmor %vm1008, %vm1136
      %vm1169 = vmor %vm1009, %vm1137
      %vm1170 = vmor %vm1010, %vm1138
      %vm1171 = vmor %vm1011, %vm1139
      %vm1172 = vmor %vm1012, %vm1140
      %vm1173 = vmor %vm1013, %vm1141
      %1174 = vset.pattern.permute.xlu0 4
      %1175 = vperm.xlu0 %1174, %v148
      %v1176 = vpop.permute.xlu0 %1175
      %1177 = vset.pattern.permute.xlu0 4
      %1178 = vperm.xlu0 %1177, %v149
      %v1179 = vpop.permute.xlu0 %1178
      %1180 = vset.pattern.permute.xlu0 4
      %1181 = vperm.xlu0 %1180, %v150
      %v1182 = vpop.permute.xlu0 %1181
      %1183 = vset.pattern.permute.xlu0 4
      %1184 = vperm.xlu0 %1183, %v151
      %v1185 = vpop.permute.xlu0 %1184
      %1186 = vset.pattern.permute.xlu0 4
      %1187 = vperm.xlu0 %1186, %v152
      %v1188 = vpop.permute.xlu0 %1187
      %1189 = vset.pattern.permute.xlu0 4
      %1190 = vperm.xlu0 %1189, %v153
      %v1191 = vpop.permute.xlu0 %1190
      %1192 = vset.pattern.permute.xlu0 4
      %1193 = vperm.xlu0 %1192, %v154
      %v1194 = vpop.permute.xlu0 %1193
      %1195 = vset.pattern.permute.xlu0 4
      %1196 = vperm.xlu0 %1195, %v155
      %v1197 = vpop.permute.xlu0 %1196
      %1198 = vset.pattern.permute.xlu0 4
      %1199 = vperm.xlu0 %1198, %v156
      %v1200 = vpop.permute.xlu0 %1199
      %1201 = vset.pattern.permute.xlu0 4
      %1202 = vperm.xlu0 %1201, %v157
      %v1203 = vpop.permute.xlu0 %1202
      %1204 = vset.pattern.permute.xlu0 4
      %1205 = vperm.xlu0 %1204, %v158
      %v1206 = vpop.permute.xlu0 %1205
      %1207 = vset.pattern.permute.xlu0 4
      %1208 = vperm.xlu0 %1207, %v159
      %v1209 = vpop.permute.xlu0 %1208
      %1210 = vset.pattern.permute.xlu0 4
      %1211 = vperm.xlu0 %1210, %v160
      %v1212 = vpop.permute.xlu0 %1211
      %1213 = vset.pattern.permute.xlu0 4
      %1214 = vperm.xlu0 %1213, %v161
      %v1215 = vpop.permute.xlu0 %1214
      %1216 = vset.pattern.permute.xlu0 4
      %1217 = vperm.xlu0 %1216, %v162
      %v1218 = vpop.permute.xlu0 %1217
      %1219 = vset.pattern.permute.xlu0 4
      %1220 = vperm.xlu0 %1219, %v163
      %v1221 = vpop.permute.xlu0 %1220
      %1222 = vset.pattern.permute.xlu0 4
      %1223 = vperm.xlu0 %1222, %v164
      %v1224 = vpop.permute.xlu0 %1223
      %1225 = vset.pattern.permute.xlu0 4
      %1226 = vperm.xlu0 %1225, %v165
      %v1227 = vpop.permute.xlu0 %1226
      %1228 = vset.pattern.permute.xlu0 4
      %1229 = vperm.xlu0 %1228, %v166
      %v1230 = vpop.permute.xlu0 %1229
      %1231 = vset.pattern.permute.xlu0 4
      %1232 = vperm.xlu0 %1231, %v167
      %v1233 = vpop.permute.xlu0 %1232
      %1234 = vset.pattern.permute.xlu0 4
      %1235 = vperm.xlu0 %1234, %v168
      %v1236 = vpop.permute.xlu0 %1235
      %1237 = vset.pattern.permute.xlu0 4
      %1238 = vperm.xlu0 %1237, %v169
      %v1239 = vpop.permute.xlu0 %1238
      %1240 = vset.pattern.permute.xlu0 4
      %1241 = vperm.xlu0 %1240, %v170
      %v1242 = vpop.permute.xlu0 %1241
      %1243 = vset.pattern.permute.xlu0 4
      %1244 = vperm.xlu0 %1243, %v171
      %v1245 = vpop.permute.xlu0 %1244
      %1246 = vset.pattern.permute.xlu0 4
      %1247 = vperm.xlu0 %1246, %v172
      %v1248 = vpop.permute.xlu0 %1247
      %1249 = vset.pattern.permute.xlu0 4
      %1250 = vperm.xlu0 %1249, %v173
      %v1251 = vpop.permute.xlu0 %1250
      %1252 = vset.pattern.permute.xlu0 4
      %1253 = vperm.xlu0 %1252, %v174
      %v1254 = vpop.permute.xlu0 %1253
      %1255 = vset.pattern.permute.xlu0 4
      %1256 = vperm.xlu0 %1255, %v175
      %v1257 = vpop.permute.xlu0 %1256
      %1258 = vset.pattern.permute.xlu0 4
      %1259 = vperm.xlu0 %1258, %v176
      %v1260 = vpop.permute.xlu0 %1259
      %1261 = vset.pattern.permute.xlu0 4
      %1262 = vperm.xlu0 %1261, %v177
      %v1263 = vpop.permute.xlu0 %1262
      %1264 = vset.pattern.permute.xlu0 4
      %1265 = vperm.xlu0 %1264, %v178
      %v1266 = vpop.permute.xlu0 %1265
      %1267 = vset.pattern.permute.xlu0 4
      %1268 = vperm.xlu0 %1267, %v179
      %v1269 = vpop.permute.xlu0 %1268
      %vm1270 = vcmp.eq.s32.totalorder %v181, %v1176
      %vm1271 = vcmp.eq.s32.totalorder %v181, %v1179
      %vm1272 = vcmp.eq.s32.totalorder %v181, %v1182
      %vm1273 = vcmp.eq.s32.totalorder %v181, %v1185
      %vm1274 = vcmp.eq.s32.totalorder %v181, %v1188
      %vm1275 = vcmp.eq.s32.totalorder %v181, %v1191
      %vm1276 = vcmp.eq.s32.totalorder %v181, %v1194
      %vm1277 = vcmp.eq.s32.totalorder %v181, %v1197
      %vm1278 = vcmp.eq.s32.totalorder %v181, %v1200
      %vm1279 = vcmp.eq.s32.totalorder %v181, %v1203
      %vm1280 = vcmp.eq.s32.totalorder %v181, %v1206
      %vm1281 = vcmp.eq.s32.totalorder %v181, %v1209
      %vm1282 = vcmp.eq.s32.totalorder %v181, %v1212
      %vm1283 = vcmp.eq.s32.totalorder %v181, %v1215
      %vm1284 = vcmp.eq.s32.totalorder %v181, %v1218
      %vm1285 = vcmp.eq.s32.totalorder %v181, %v1221
      %vm1286 = vcmp.eq.s32.totalorder %v181, %v1224
      %vm1287 = vcmp.eq.s32.totalorder %v181, %v1227
      %vm1288 = vcmp.eq.s32.totalorder %v181, %v1230
      %vm1289 = vcmp.eq.s32.totalorder %v181, %v1233
      %vm1290 = vcmp.eq.s32.totalorder %v181, %v1236
      %vm1291 = vcmp.eq.s32.totalorder %v181, %v1239
      %vm1292 = vcmp.eq.s32.totalorder %v181, %v1242
      %vm1293 = vcmp.eq.s32.totalorder %v181, %v1245
      %vm1294 = vcmp.eq.s32.totalorder %v181, %v1248
      %vm1295 = vcmp.eq.s32.totalorder %v181, %v1251
      %vm1296 = vcmp.eq.s32.totalorder %v181, %v1254
      %vm1297 = vcmp.eq.s32.totalorder %v181, %v1257
      %vm1298 = vcmp.eq.s32.totalorder %v181, %v1260
      %vm1299 = vcmp.eq.s32.totalorder %v181, %v1263
      %vm1300 = vcmp.eq.s32.totalorder %v181, %v1266
      %vm1301 = vcmp.eq.s32.totalorder %v181, %v1269
      %vm1302 = vmor %vm1142, %vm1270
      %vm1303 = vmor %vm1143, %vm1271
      %vm1304 = vmor %vm1144, %vm1272
      %vm1305 = vmor %vm1145, %vm1273
      %vm1306 = vmor %vm1146, %vm1274
      %vm1307 = vmor %vm1147, %vm1275
      %vm1308 = vmor %vm1148, %vm1276
      %vm1309 = vmor %vm1149, %vm1277
      %vm1310 = vmor %vm1150, %vm1278
      %vm1311 = vmor %vm1151, %vm1279
      %vm1312 = vmor %vm1152, %vm1280
      %vm1313 = vmor %vm1153, %vm1281
      %vm1314 = vmor %vm1154, %vm1282
      %vm1315 = vmor %vm1155, %vm1283
      %vm1316 = vmor %vm1156, %vm1284
      %vm1317 = vmor %vm1157, %vm1285
      %vm1318 = vmor %vm1158, %vm1286
      %vm1319 = vmor %vm1159, %vm1287
      %vm1320 = vmor %vm1160, %vm1288
      %vm1321 = vmor %vm1161, %vm1289
      %vm1322 = vmor %vm1162, %vm1290
      %vm1323 = vmor %vm1163, %vm1291
      %vm1324 = vmor %vm1164, %vm1292
      %vm1325 = vmor %vm1165, %vm1293
      %vm1326 = vmor %vm1166, %vm1294
      %vm1327 = vmor %vm1167, %vm1295
      %vm1328 = vmor %vm1168, %vm1296
      %vm1329 = vmor %vm1169, %vm1297
      %vm1330 = vmor %vm1170, %vm1298
      %vm1331 = vmor %vm1171, %vm1299
      %vm1332 = vmor %vm1172, %vm1300
      %vm1333 = vmor %vm1173, %vm1301
      %1334 = vset.pattern.permute.xlu0 5
      %1335 = vperm.xlu0 %1334, %v148
      %v1336 = vpop.permute.xlu0 %1335
      %1337 = vset.pattern.permute.xlu0 5
      %1338 = vperm.xlu0 %1337, %v149
      %v1339 = vpop.permute.xlu0 %1338
      %1340 = vset.pattern.permute.xlu0 5
      %1341 = vperm.xlu0 %1340, %v150
      %v1342 = vpop.permute.xlu0 %1341
      %1343 = vset.pattern.permute.xlu0 5
      %1344 = vperm.xlu0 %1343, %v151
      %v1345 = vpop.permute.xlu0 %1344
      %1346 = vset.pattern.permute.xlu0 5
      %1347 = vperm.xlu0 %1346, %v152
      %v1348 = vpop.permute.xlu0 %1347
      %1349 = vset.pattern.permute.xlu0 5
      %1350 = vperm.xlu0 %1349, %v153
      %v1351 = vpop.permute.xlu0 %1350
      %1352 = vset.pattern.permute.xlu0 5
      %1353 = vperm.xlu0 %1352, %v154
      %v1354 = vpop.permute.xlu0 %1353
      %1355 = vset.pattern.permute.xlu0 5
      %1356 = vperm.xlu0 %1355, %v155
      %v1357 = vpop.permute.xlu0 %1356
      %1358 = vset.pattern.permute.xlu0 5
      %1359 = vperm.xlu0 %1358, %v156
      %v1360 = vpop.permute.xlu0 %1359
      %1361 = vset.pattern.permute.xlu0 5
      %1362 = vperm.xlu0 %1361, %v157
      %v1363 = vpop.permute.xlu0 %1362
      %1364 = vset.pattern.permute.xlu0 5
      %1365 = vperm.xlu0 %1364, %v158
      %v1366 = vpop.permute.xlu0 %1365
      %1367 = vset.pattern.permute.xlu0 5
      %1368 = vperm.xlu0 %1367, %v159
      %v1369 = vpop.permute.xlu0 %1368
      %1370 = vset.pattern.permute.xlu0 5
      %1371 = vperm.xlu0 %1370, %v160
      %v1372 = vpop.permute.xlu0 %1371
      %1373 = vset.pattern.permute.xlu0 5
      %1374 = vperm.xlu0 %1373, %v161
      %v1375 = vpop.permute.xlu0 %1374
      %1376 = vset.pattern.permute.xlu0 5
      %1377 = vperm.xlu0 %1376, %v162
      %v1378 = vpop.permute.xlu0 %1377
      %1379 = vset.pattern.permute.xlu0 5
      %1380 = vperm.xlu0 %1379, %v163
      %v1381 = vpop.permute.xlu0 %1380
      %1382 = vset.pattern.permute.xlu0 5
      %1383 = vperm.xlu0 %1382, %v164
      %v1384 = vpop.permute.xlu0 %1383
      %1385 = vset.pattern.permute.xlu0 5
      %1386 = vperm.xlu0 %1385, %v165
      %v1387 = vpop.permute.xlu0 %1386
      %1388 = vset.pattern.permute.xlu0 5
      %1389 = vperm.xlu0 %1388, %v166
      %v1390 = vpop.permute.xlu0 %1389
      %1391 = vset.pattern.permute.xlu0 5
      %1392 = vperm.xlu0 %1391, %v167
      %v1393 = vpop.permute.xlu0 %1392
      %1394 = vset.pattern.permute.xlu0 5
      %1395 = vperm.xlu0 %1394, %v168
      %v1396 = vpop.permute.xlu0 %1395
      %1397 = vset.pattern.permute.xlu0 5
      %1398 = vperm.xlu0 %1397, %v169
      %v1399 = vpop.permute.xlu0 %1398
      %1400 = vset.pattern.permute.xlu0 5
      %1401 = vperm.xlu0 %1400, %v170
      %v1402 = vpop.permute.xlu0 %1401
      %1403 = vset.pattern.permute.xlu0 5
      %1404 = vperm.xlu0 %1403, %v171
      %v1405 = vpop.permute.xlu0 %1404
      %1406 = vset.pattern.permute.xlu0 5
      %1407 = vperm.xlu0 %1406, %v172
      %v1408 = vpop.permute.xlu0 %1407
      %1409 = vset.pattern.permute.xlu0 5
      %1410 = vperm.xlu0 %1409, %v173
      %v1411 = vpop.permute.xlu0 %1410
      %1412 = vset.pattern.permute.xlu0 5
      %1413 = vperm.xlu0 %1412, %v174
      %v1414 = vpop.permute.xlu0 %1413
      %1415 = vset.pattern.permute.xlu0 5
      %1416 = vperm.xlu0 %1415, %v175
      %v1417 = vpop.permute.xlu0 %1416
      %1418 = vset.pattern.permute.xlu0 5
      %1419 = vperm.xlu0 %1418, %v176
      %v1420 = vpop.permute.xlu0 %1419
      %1421 = vset.pattern.permute.xlu0 5
      %1422 = vperm.xlu0 %1421, %v177
      %v1423 = vpop.permute.xlu0 %1422
      %1424 = vset.pattern.permute.xlu0 5
      %1425 = vperm.xlu0 %1424, %v178
      %v1426 = vpop.permute.xlu0 %1425
      %1427 = vset.pattern.permute.xlu0 5
      %1428 = vperm.xlu0 %1427, %v179
      %v1429 = vpop.permute.xlu0 %1428
      %vm1430 = vcmp.eq.s32.totalorder %v181, %v1336
      %vm1431 = vcmp.eq.s32.totalorder %v181, %v1339
      %vm1432 = vcmp.eq.s32.totalorder %v181, %v1342
      %vm1433 = vcmp.eq.s32.totalorder %v181, %v1345
      %vm1434 = vcmp.eq.s32.totalorder %v181, %v1348
      %vm1435 = vcmp.eq.s32.totalorder %v181, %v1351
      %vm1436 = vcmp.eq.s32.totalorder %v181, %v1354
      %vm1437 = vcmp.eq.s32.totalorder %v181, %v1357
      %vm1438 = vcmp.eq.s32.totalorder %v181, %v1360
      %vm1439 = vcmp.eq.s32.totalorder %v181, %v1363
      %vm1440 = vcmp.eq.s32.totalorder %v181, %v1366
      %vm1441 = vcmp.eq.s32.totalorder %v181, %v1369
      %vm1442 = vcmp.eq.s32.totalorder %v181, %v1372
      %vm1443 = vcmp.eq.s32.totalorder %v181, %v1375
      %vm1444 = vcmp.eq.s32.totalorder %v181, %v1378
      %vm1445 = vcmp.eq.s32.totalorder %v181, %v1381
      %vm1446 = vcmp.eq.s32.totalorder %v181, %v1384
      %vm1447 = vcmp.eq.s32.totalorder %v181, %v1387
      %vm1448 = vcmp.eq.s32.totalorder %v181, %v1390
      %vm1449 = vcmp.eq.s32.totalorder %v181, %v1393
      %vm1450 = vcmp.eq.s32.totalorder %v181, %v1396
      %vm1451 = vcmp.eq.s32.totalorder %v181, %v1399
      %vm1452 = vcmp.eq.s32.totalorder %v181, %v1402
      %vm1453 = vcmp.eq.s32.totalorder %v181, %v1405
      %vm1454 = vcmp.eq.s32.totalorder %v181, %v1408
      %vm1455 = vcmp.eq.s32.totalorder %v181, %v1411
      %vm1456 = vcmp.eq.s32.totalorder %v181, %v1414
      %vm1457 = vcmp.eq.s32.totalorder %v181, %v1417
      %vm1458 = vcmp.eq.s32.totalorder %v181, %v1420
      %vm1459 = vcmp.eq.s32.totalorder %v181, %v1423
      %vm1460 = vcmp.eq.s32.totalorder %v181, %v1426
      %vm1461 = vcmp.eq.s32.totalorder %v181, %v1429
      %vm1462 = vmor %vm1302, %vm1430
      %vm1463 = vmor %vm1303, %vm1431
      %vm1464 = vmor %vm1304, %vm1432
      %vm1465 = vmor %vm1305, %vm1433
      %vm1466 = vmor %vm1306, %vm1434
      %vm1467 = vmor %vm1307, %vm1435
      %vm1468 = vmor %vm1308, %vm1436
      %vm1469 = vmor %vm1309, %vm1437
      %vm1470 = vmor %vm1310, %vm1438
      %vm1471 = vmor %vm1311, %vm1439
      %vm1472 = vmor %vm1312, %vm1440
      %vm1473 = vmor %vm1313, %vm1441
      %vm1474 = vmor %vm1314, %vm1442
      %vm1475 = vmor %vm1315, %vm1443
      %vm1476 = vmor %vm1316, %vm1444
      %vm1477 = vmor %vm1317, %vm1445
      %vm1478 = vmor %vm1318, %vm1446
      %vm1479 = vmor %vm1319, %vm1447
      %vm1480 = vmor %vm1320, %vm1448
      %vm1481 = vmor %vm1321, %vm1449
      %vm1482 = vmor %vm1322, %vm1450
      %vm1483 = vmor %vm1323, %vm1451
      %vm1484 = vmor %vm1324, %vm1452
      %vm1485 = vmor %vm1325, %vm1453
      %vm1486 = vmor %vm1326, %vm1454
      %vm1487 = vmor %vm1327, %vm1455
      %vm1488 = vmor %vm1328, %vm1456
      %vm1489 = vmor %vm1329, %vm1457
      %vm1490 = vmor %vm1330, %vm1458
      %vm1491 = vmor %vm1331, %vm1459
      %vm1492 = vmor %vm1332, %vm1460
      %vm1493 = vmor %vm1333, %vm1461
      %1494 = vset.pattern.permute.xlu0 6
      %1495 = vperm.xlu0 %1494, %v148
      %v1496 = vpop.permute.xlu0 %1495
      %1497 = vset.pattern.permute.xlu0 6
      %1498 = vperm.xlu0 %1497, %v149
      %v1499 = vpop.permute.xlu0 %1498
      %1500 = vset.pattern.permute.xlu0 6
      %1501 = vperm.xlu0 %1500, %v150
      %v1502 = vpop.permute.xlu0 %1501
      %1503 = vset.pattern.permute.xlu0 6
      %1504 = vperm.xlu0 %1503, %v151
      %v1505 = vpop.permute.xlu0 %1504
      %1506 = vset.pattern.permute.xlu0 6
      %1507 = vperm.xlu0 %1506, %v152
      %v1508 = vpop.permute.xlu0 %1507
      %1509 = vset.pattern.permute.xlu0 6
      %1510 = vperm.xlu0 %1509, %v153
      %v1511 = vpop.permute.xlu0 %1510
      %1512 = vset.pattern.permute.xlu0 6
      %1513 = vperm.xlu0 %1512, %v154
      %v1514 = vpop.permute.xlu0 %1513
      %1515 = vset.pattern.permute.xlu0 6
      %1516 = vperm.xlu0 %1515, %v155
      %v1517 = vpop.permute.xlu0 %1516
      %1518 = vset.pattern.permute.xlu0 6
      %1519 = vperm.xlu0 %1518, %v156
      %v1520 = vpop.permute.xlu0 %1519
      %1521 = vset.pattern.permute.xlu0 6
      %1522 = vperm.xlu0 %1521, %v157
      %v1523 = vpop.permute.xlu0 %1522
      %1524 = vset.pattern.permute.xlu0 6
      %1525 = vperm.xlu0 %1524, %v158
      %v1526 = vpop.permute.xlu0 %1525
      %1527 = vset.pattern.permute.xlu0 6
      %1528 = vperm.xlu0 %1527, %v159
      %v1529 = vpop.permute.xlu0 %1528
      %1530 = vset.pattern.permute.xlu0 6
      %1531 = vperm.xlu0 %1530, %v160
      %v1532 = vpop.permute.xlu0 %1531
      %1533 = vset.pattern.permute.xlu0 6
      %1534 = vperm.xlu0 %1533, %v161
      %v1535 = vpop.permute.xlu0 %1534
      %1536 = vset.pattern.permute.xlu0 6
      %1537 = vperm.xlu0 %1536, %v162
      %v1538 = vpop.permute.xlu0 %1537
      %1539 = vset.pattern.permute.xlu0 6
      %1540 = vperm.xlu0 %1539, %v163
      %v1541 = vpop.permute.xlu0 %1540
      %1542 = vset.pattern.permute.xlu0 6
      %1543 = vperm.xlu0 %1542, %v164
      %v1544 = vpop.permute.xlu0 %1543
      %1545 = vset.pattern.permute.xlu0 6
      %1546 = vperm.xlu0 %1545, %v165
      %v1547 = vpop.permute.xlu0 %1546
      %1548 = vset.pattern.permute.xlu0 6
      %1549 = vperm.xlu0 %1548, %v166
      %v1550 = vpop.permute.xlu0 %1549
      %1551 = vset.pattern.permute.xlu0 6
      %1552 = vperm.xlu0 %1551, %v167
      %v1553 = vpop.permute.xlu0 %1552
      %1554 = vset.pattern.permute.xlu0 6
      %1555 = vperm.xlu0 %1554, %v168
      %v1556 = vpop.permute.xlu0 %1555
      %1557 = vset.pattern.permute.xlu0 6
      %1558 = vperm.xlu0 %1557, %v169
      %v1559 = vpop.permute.xlu0 %1558
      %1560 = vset.pattern.permute.xlu0 6
      %1561 = vperm.xlu0 %1560, %v170
      %v1562 = vpop.permute.xlu0 %1561
      %1563 = vset.pattern.permute.xlu0 6
      %1564 = vperm.xlu0 %1563, %v171
      %v1565 = vpop.permute.xlu0 %1564
      %1566 = vset.pattern.permute.xlu0 6
      %1567 = vperm.xlu0 %1566, %v172
      %v1568 = vpop.permute.xlu0 %1567
      %1569 = vset.pattern.permute.xlu0 6
      %1570 = vperm.xlu0 %1569, %v173
      %v1571 = vpop.permute.xlu0 %1570
      %1572 = vset.pattern.permute.xlu0 6
      %1573 = vperm.xlu0 %1572, %v174
      %v1574 = vpop.permute.xlu0 %1573
      %1575 = vset.pattern.permute.xlu0 6
      %1576 = vperm.xlu0 %1575, %v175
      %v1577 = vpop.permute.xlu0 %1576
      %1578 = vset.pattern.permute.xlu0 6
      %1579 = vperm.xlu0 %1578, %v176
      %v1580 = vpop.permute.xlu0 %1579
      %1581 = vset.pattern.permute.xlu0 6
      %1582 = vperm.xlu0 %1581, %v177
      %v1583 = vpop.permute.xlu0 %1582
      %1584 = vset.pattern.permute.xlu0 6
      %1585 = vperm.xlu0 %1584, %v178
      %v1586 = vpop.permute.xlu0 %1585
      %1587 = vset.pattern.permute.xlu0 6
      %1588 = vperm.xlu0 %1587, %v179
      %v1589 = vpop.permute.xlu0 %1588
      %vm1590 = vcmp.eq.s32.totalorder %v181, %v1496
      %vm1591 = vcmp.eq.s32.totalorder %v181, %v1499
      %vm1592 = vcmp.eq.s32.totalorder %v181, %v1502
      %vm1593 = vcmp.eq.s32.totalorder %v181, %v1505
      %vm1594 = vcmp.eq.s32.totalorder %v181, %v1508
      %vm1595 = vcmp.eq.s32.totalorder %v181, %v1511
      %vm1596 = vcmp.eq.s32.totalorder %v181, %v1514
      %vm1597 = vcmp.eq.s32.totalorder %v181, %v1517
      %vm1598 = vcmp.eq.s32.totalorder %v181, %v1520
      %vm1599 = vcmp.eq.s32.totalorder %v181, %v1523
      %vm1600 = vcmp.eq.s32.totalorder %v181, %v1526
      %vm1601 = vcmp.eq.s32.totalorder %v181, %v1529
      %vm1602 = vcmp.eq.s32.totalorder %v181, %v1532
      %vm1603 = vcmp.eq.s32.totalorder %v181, %v1535
      %vm1604 = vcmp.eq.s32.totalorder %v181, %v1538
      %vm1605 = vcmp.eq.s32.totalorder %v181, %v1541
      %vm1606 = vcmp.eq.s32.totalorder %v181, %v1544
      %vm1607 = vcmp.eq.s32.totalorder %v181, %v1547
      %vm1608 = vcmp.eq.s32.totalorder %v181, %v1550
      %vm1609 = vcmp.eq.s32.totalorder %v181, %v1553
      %vm1610 = vcmp.eq.s32.totalorder %v181, %v1556
      %vm1611 = vcmp.eq.s32.totalorder %v181, %v1559
      %vm1612 = vcmp.eq.s32.totalorder %v181, %v1562
      %vm1613 = vcmp.eq.s32.totalorder %v181, %v1565
      %vm1614 = vcmp.eq.s32.totalorder %v181, %v1568
      %vm1615 = vcmp.eq.s32.totalorder %v181, %v1571
      %vm1616 = vcmp.eq.s32.totalorder %v181, %v1574
      %vm1617 = vcmp.eq.s32.totalorder %v181, %v1577
      %vm1618 = vcmp.eq.s32.totalorder %v181, %v1580
      %vm1619 = vcmp.eq.s32.totalorder %v181, %v1583
      %vm1620 = vcmp.eq.s32.totalorder %v181, %v1586
      %vm1621 = vcmp.eq.s32.totalorder %v181, %v1589
      %vm1622 = vmor %vm1462, %vm1590
      %vm1623 = vmor %vm1463, %vm1591
      %vm1624 = vmor %vm1464, %vm1592
      %vm1625 = vmor %vm1465, %vm1593
      %vm1626 = vmor %vm1466, %vm1594
      %vm1627 = vmor %vm1467, %vm1595
      %vm1628 = vmor %vm1468, %vm1596
      %vm1629 = vmor %vm1469, %vm1597
      %vm1630 = vmor %vm1470, %vm1598
      %vm1631 = vmor %vm1471, %vm1599
      %vm1632 = vmor %vm1472, %vm1600
      %vm1633 = vmor %vm1473, %vm1601
      %vm1634 = vmor %vm1474, %vm1602
      %vm1635 = vmor %vm1475, %vm1603
      %vm1636 = vmor %vm1476, %vm1604
      %vm1637 = vmor %vm1477, %vm1605
      %vm1638 = vmor %vm1478, %vm1606
      %vm1639 = vmor %vm1479, %vm1607
      %vm1640 = vmor %vm1480, %vm1608
      %vm1641 = vmor %vm1481, %vm1609
      %vm1642 = vmor %vm1482, %vm1610
      %vm1643 = vmor %vm1483, %vm1611
      %vm1644 = vmor %vm1484, %vm1612
      %vm1645 = vmor %vm1485, %vm1613
      %vm1646 = vmor %vm1486, %vm1614
      %vm1647 = vmor %vm1487, %vm1615
      %vm1648 = vmor %vm1488, %vm1616
      %vm1649 = vmor %vm1489, %vm1617
      %vm1650 = vmor %vm1490, %vm1618
      %vm1651 = vmor %vm1491, %vm1619
      %vm1652 = vmor %vm1492, %vm1620
      %vm1653 = vmor %vm1493, %vm1621
      %v1654 = vsel %vm1622, 1, 0
      %v1655 = vsel %vm1623, 1, 0
      %v1656 = vsel %vm1624, 1, 0
      %v1657 = vsel %vm1625, 1, 0
      %v1658 = vsel %vm1626, 1, 0
      %v1659 = vsel %vm1627, 1, 0
      %v1660 = vsel %vm1628, 1, 0
      %v1661 = vsel %vm1629, 1, 0
      %v1662 = vsel %vm1630, 1, 0
      %v1663 = vsel %vm1631, 1, 0
      %v1664 = vsel %vm1632, 1, 0
      %v1665 = vsel %vm1633, 1, 0
      %v1666 = vsel %vm1634, 1, 0
      %v1667 = vsel %vm1635, 1, 0
      %v1668 = vsel %vm1636, 1, 0
      %v1669 = vsel %vm1637, 1, 0
      %v1670 = vsel %vm1638, 1, 0
      %v1671 = vsel %vm1639, 1, 0
      %v1672 = vsel %vm1640, 1, 0
      %v1673 = vsel %vm1641, 1, 0
      %v1674 = vsel %vm1642, 1, 0
      %v1675 = vsel %vm1643, 1, 0
      %v1676 = vsel %vm1644, 1, 0
      %v1677 = vsel %vm1645, 1, 0
      %v1678 = vsel %vm1646, 1, 0
      %v1679 = vsel %vm1647, 1, 0
      %v1680 = vsel %vm1648, 1, 0
      %v1681 = vsel %vm1649, 1, 0
      %v1682 = vsel %vm1650, 1, 0
      %v1683 = vsel %vm1651, 1, 0
      %v1684 = vsel %vm1652, 1, 0
      %v1685 = vsel %vm1653, 1, 0
      %v1686 = vcvt.s32.f32 %v1654
      %v1687 = vcvt.s32.f32 %v1655
      %v1688 = vcvt.s32.f32 %v1656
      %v1689 = vcvt.s32.f32 %v1657
      %v1690 = vcvt.s32.f32 %v1658
      %v1691 = vcvt.s32.f32 %v1659
      %v1692 = vcvt.s32.f32 %v1660
      %v1693 = vcvt.s32.f32 %v1661
      %v1694 = vcvt.s32.f32 %v1662
      %v1695 = vcvt.s32.f32 %v1663
      %v1696 = vcvt.s32.f32 %v1664
      %v1697 = vcvt.s32.f32 %v1665
      %v1698 = vcvt.s32.f32 %v1666
      %v1699 = vcvt.s32.f32 %v1667
      %v1700 = vcvt.s32.f32 %v1668
      %v1701 = vcvt.s32.f32 %v1669
      %v1702 = vcvt.s32.f32 %v1670
      %v1703 = vcvt.s32.f32 %v1671
      %v1704 = vcvt.s32.f32 %v1672
      %v1705 = vcvt.s32.f32 %v1673
      %v1706 = vcvt.s32.f32 %v1674
      %v1707 = vcvt.s32.f32 %v1675
      %v1708 = vcvt.s32.f32 %v1676
      %v1709 = vcvt.s32.f32 %v1677
      %v1710 = vcvt.s32.f32 %v1678
      %v1711 = vcvt.s32.f32 %v1679
      %v1712 = vcvt.s32.f32 %v1680
      %v1713 = vcvt.s32.f32 %v1681
      %v1714 = vcvt.s32.f32 %v1682
      %v1715 = vcvt.s32.f32 %v1683
      %v1716 = vcvt.s32.f32 %v1684
      %v1717 = vcvt.s32.f32 %v1685
      %v1718 = vpack.c.bf16 %v1687, %v1686
      %v1719 = vpack.c.bf16 %v1689, %v1688
      %v1720 = vpack.c.bf16 %v1691, %v1690
      %v1721 = vpack.c.bf16 %v1693, %v1692
      %v1722 = vpack.c.bf16 %v1695, %v1694
      %v1723 = vpack.c.bf16 %v1697, %v1696
      %v1724 = vpack.c.bf16 %v1699, %v1698
      %v1725 = vpack.c.bf16 %v1701, %v1700
      %v1726 = vpack.c.bf16 %v1703, %v1702
      %v1727 = vpack.c.bf16 %v1705, %v1704
      %v1728 = vpack.c.bf16 %v1707, %v1706
      %v1729 = vpack.c.bf16 %v1709, %v1708
      %v1730 = vpack.c.bf16 %v1711, %v1710
      %v1731 = vpack.c.bf16 %v1713, %v1712
      %v1732 = vpack.c.bf16 %v1715, %v1714
      %v1733 = vpack.c.bf16 %v1717, %v1716
      %v1734 = vld [vmem:[%s1 + $0x40] sm:$0xf]
      %v1735 = vld [vmem:[%s1 + $0x44] sm:$0xf]
      %v1736 = vld [vmem:[%s1 + $0x48] sm:$0xf]
      %v1737 = vld [vmem:[%s1 + $0x4c] sm:$0xf]
      %v1738 = vld [vmem:[%s1 + $0x50] sm:$0xf]
      %v1739 = vld [vmem:[%s1 + $0x54] sm:$0xf]
      %v1740 = vld [vmem:[%s1 + $0x58] sm:$0xf]
      %v1741 = vld [vmem:[%s1 + $0x5c] sm:$0xf]
      %v1742 = vld [vmem:[%s1 + $0x60] sm:$0xf]
      %v1743 = vld [vmem:[%s1 + $0x64] sm:$0xf]
      %v1744 = vld [vmem:[%s1 + $0x68] sm:$0xf]
      %v1745 = vld [vmem:[%s1 + $0x6c] sm:$0xf]
      %v1746 = vld [vmem:[%s1 + $0x70] sm:$0xf]
      %v1747 = vld [vmem:[%s1 + $0x74] sm:$0xf]
      %v1748 = vld [vmem:[%s1 + $0x78] sm:$0xf]
      %v1749 = vld [vmem:[%s1 + $0x7c] sm:$0xf]
      %v1766 = vunpack.c.l.b16 %v1734
      %v1767 = vunpack.c.l.b16 %v1735
      %v1768 = vunpack.c.l.b16 %v1736
      %v1769 = vunpack.c.l.b16 %v1737
      %v1770 = vunpack.c.l.b16 %v1738
      %v1771 = vunpack.c.l.b16 %v1739
      %v1772 = vunpack.c.l.b16 %v1740
      %v1773 = vunpack.c.l.b16 %v1741
      %v1774 = vunpack.c.l.b16 %v1742
      %v1775 = vunpack.c.l.b16 %v1743
      %v1776 = vunpack.c.l.b16 %v1744
      %v1777 = vunpack.c.l.b16 %v1745
      %v1778 = vunpack.c.l.b16 %v1746
      %v1779 = vunpack.c.l.b16 %v1747
      %v1780 = vunpack.c.l.b16 %v1748
      %v1781 = vunpack.c.l.b16 %v1749
      %v1782 = vpack.c.b16 %v1767, %v1766
      %v1783 = vpack.c.b16 %v1769, %v1768
      %v1784 = vpack.c.b16 %v1771, %v1770
      %v1785 = vpack.c.b16 %v1773, %v1772
      %v1786 = vpack.c.b16 %v1775, %v1774
      %v1787 = vpack.c.b16 %v1777, %v1776
      %v1788 = vpack.c.b16 %v1779, %v1778
      %v1789 = vpack.c.b16 %v1781, %v1780
      %1798 = vmatprep.subr.bf16.mxu0 0
      %1799 = vmatpush1.bf16.msra.mxu0 %v1782
      %1800 = vmatprep.subr.bf16.mxu0 0
      %1801 = vmatpush1.bf16.msra.mxu0 %v1783
      %1802 = vmatprep.subr.bf16.mxu0 0
      %1803 = vmatpush1.bf16.msra.mxu0 %v1784
      %1804 = vmatprep.subr.bf16.mxu0 0
      %1805 = vmatpush1.bf16.msra.mxu0 %v1785
      %1806 = vmatprep.subr.bf16.mxu0 0
      %1807 = vmatpush1.bf16.msra.mxu0 %v1786
      %1808 = vmatprep.subr.bf16.mxu0 0
      %1809 = vmatpush1.bf16.msra.mxu0 %v1787
      %1810 = vmatprep.subr.bf16.mxu0 0
      %1811 = vmatpush1.bf16.msra.mxu0 %v1788
      %1812 = vmatprep.subr.bf16.mxu0 0
      %1813 = vmatpush1.bf16.msra.mxu0 %v1789
      %1814 = vmatprep.subr.bf16.mxu0 0
      %1815 = vmatpush1.bf16.msra.mxu0 0
      %1816 = vmatprep.subr.bf16.mxu0 0
      %1817 = vmatpush1.bf16.msra.mxu0 0
      %1818 = vmatprep.subr.bf16.mxu0 0
      %1819 = vmatpush1.bf16.msra.mxu0 0
      %1820 = vmatprep.subr.bf16.mxu0 0
      %1821 = vmatpush1.bf16.msra.mxu0 0
      %1822 = vmatprep.subr.bf16.mxu0 0
      %1823 = vmatpush1.bf16.msra.mxu0 0
      %1824 = vmatprep.subr.bf16.mxu0 0
      %1825 = vmatpush1.bf16.msra.mxu0 0
      %1826 = vmatprep.subr.bf16.mxu0 0
      %1827 = vmatpush1.bf16.msra.mxu0 0
      %1828 = vmatprep.subr.bf16.mxu0 0
      %1829 = vmatpush1.bf16.msra.mxu0 0
      %1830 = vmatprep.mubr.bf16.mxu0 0
      %1831 = vmatmul.mubr.bf16.gmra.mrb[0].mxu0 %v1718
      %v1832 = vpop.f32.mrb[0].mxu0
      %v1833 = vadd.f32 0.0, %v1832
      %v1834 = vpop.f32.mrb[0].mxu0
      %v1835 = vpop.f32.mrb[0].mxu0
      %v1836 = vadd.f32 0.0, %v1835
      %v1837 = vpop.f32.mrb[0].mxu0
      %1838 = vmatprep.mubr.bf16.mxu0 0
      %1839 = vmatmul.mubr.bf16.gmra.mrb[0].mxu0 %v1719
      %v1840 = vpop.f32.mrb[0].mxu0
      %v1841 = vadd.f32 0.0, %v1840
      %v1842 = vpop.f32.mrb[0].mxu0
      %v1843 = vpop.f32.mrb[0].mxu0
      %v1844 = vadd.f32 0.0, %v1843
      %v1845 = vpop.f32.mrb[0].mxu0
      %1846 = vmatprep.mubr.bf16.mxu0 0
      %1847 = vmatmul.mubr.bf16.gmra.mrb[0].mxu0 %v1720
      %v1848 = vpop.f32.mrb[0].mxu0
      %v1849 = vadd.f32 0.0, %v1848
      %v1850 = vpop.f32.mrb[0].mxu0
      %v1851 = vpop.f32.mrb[0].mxu0
      %v1852 = vadd.f32 0.0, %v1851
      %v1853 = vpop.f32.mrb[0].mxu0
      %1854 = vmatprep.mubr.bf16.mxu0 0
      %1855 = vmatmul.mubr.bf16.gmra.mrb[0].mxu0 %v1721
      %v1856 = vpop.f32.mrb[0].mxu0
      %v1857 = vadd.f32 0.0, %v1856
      %v1858 = vpop.f32.mrb[0].mxu0
      %v1859 = vpop.f32.mrb[0].mxu0
      %v1860 = vadd.f32 0.0, %v1859
      %v1861 = vpop.f32.mrb[0].mxu0
      %1862 = vmatprep.mubr.bf16.mxu0 0
      %1863 = vmatmul.mubr.bf16.gmra.mrb[0].mxu0 %v1722
      %v1864 = vpop.f32.mrb[0].mxu0
      %v1865 = vadd.f32 0.0, %v1864
      %v1866 = vpop.f32.mrb[0].mxu0
      %v1867 = vpop.f32.mrb[0].mxu0
      %v1868 = vadd.f32 0.0, %v1867
      %v1869 = vpop.f32.mrb[0].mxu0
      %1870 = vmatprep.mubr.bf16.mxu0 0
      %1871 = vmatmul.mubr.bf16.gmra.mrb[0].mxu0 %v1723
      %v1872 = vpop.f32.mrb[0].mxu0
      %v1873 = vadd.f32 0.0, %v1872
      %v1874 = vpop.f32.mrb[0].mxu0
      %v1875 = vpop.f32.mrb[0].mxu0
      %v1876 = vadd.f32 0.0, %v1875
      %v1877 = vpop.f32.mrb[0].mxu0
      %1878 = vmatprep.mubr.bf16.mxu0 0
      %1879 = vmatmul.mubr.bf16.gmra.mrb[0].mxu0 %v1724
      %v1880 = vpop.f32.mrb[0].mxu0
      %v1881 = vadd.f32 0.0, %v1880
      %v1882 = vpop.f32.mrb[0].mxu0
      %v1883 = vpop.f32.mrb[0].mxu0
      %v1884 = vadd.f32 0.0, %v1883
      %v1885 = vpop.f32.mrb[0].mxu0
      %1886 = vmatprep.mubr.bf16.mxu0 0
      %1887 = vmatmul.mubr.bf16.gmra.mrb[0].mxu0 %v1725
      %v1888 = vpop.f32.mrb[0].mxu0
      %v1889 = vadd.f32 0.0, %v1888
      %v1890 = vpop.f32.mrb[0].mxu0
      %v1891 = vpop.f32.mrb[0].mxu0
      %v1892 = vadd.f32 0.0, %v1891
      %v1893 = vpop.f32.mrb[0].mxu0
      %1894 = vmatprep.mubr.bf16.mxu0 0
      %1895 = vmatmul.mubr.bf16.gmra.mrb[0].mxu0 %v1726
      %v1896 = vpop.f32.mrb[0].mxu0
      %v1897 = vadd.f32 0.0, %v1896
      %v1898 = vpop.f32.mrb[0].mxu0
      %v1899 = vpop.f32.mrb[0].mxu0
      %v1900 = vadd.f32 0.0, %v1899
      %v1901 = vpop.f32.mrb[0].mxu0
      %1902 = vmatprep.mubr.bf16.mxu0 0
      %1903 = vmatmul.mubr.bf16.gmra.mrb[0].mxu0 %v1727
      %v1904 = vpop.f32.mrb[0].mxu0
      %v1905 = vadd.f32 0.0, %v1904
      %v1906 = vpop.f32.mrb[0].mxu0
      %v1907 = vpop.f32.mrb[0].mxu0
      %v1908 = vadd.f32 0.0, %v1907
      %v1909 = vpop.f32.mrb[0].mxu0
      %1910 = vmatprep.mubr.bf16.mxu0 0
      %1911 = vmatmul.mubr.bf16.gmra.mrb[0].mxu0 %v1728
      %v1912 = vpop.f32.mrb[0].mxu0
      %v1913 = vadd.f32 0.0, %v1912
      %v1914 = vpop.f32.mrb[0].mxu0
      %v1915 = vpop.f32.mrb[0].mxu0
      %v1916 = vadd.f32 0.0, %v1915
      %v1917 = vpop.f32.mrb[0].mxu0
      %1918 = vmatprep.mubr.bf16.mxu0 0
      %1919 = vmatmul.mubr.bf16.gmra.mrb[0].mxu0 %v1729
      %v1920 = vpop.f32.mrb[0].mxu0
      %v1921 = vadd.f32 0.0, %v1920
      %v1922 = vpop.f32.mrb[0].mxu0
      %v1923 = vpop.f32.mrb[0].mxu0
      %v1924 = vadd.f32 0.0, %v1923
      %v1925 = vpop.f32.mrb[0].mxu0
      %1926 = vmatprep.mubr.bf16.mxu0 0
      %1927 = vmatmul.mubr.bf16.gmra.mrb[0].mxu0 %v1730
      %v1928 = vpop.f32.mrb[0].mxu0
      %v1929 = vadd.f32 0.0, %v1928
      %v1930 = vpop.f32.mrb[0].mxu0
      %v1931 = vpop.f32.mrb[0].mxu0
      %v1932 = vadd.f32 0.0, %v1931
      %v1933 = vpop.f32.mrb[0].mxu0
      %1934 = vmatprep.mubr.bf16.mxu0 0
      %1935 = vmatmul.mubr.bf16.gmra.mrb[0].mxu0 %v1731
      %v1936 = vpop.f32.mrb[0].mxu0
      %v1937 = vadd.f32 0.0, %v1936
      %v1938 = vpop.f32.mrb[0].mxu0
      %v1939 = vpop.f32.mrb[0].mxu0
      %v1940 = vadd.f32 0.0, %v1939
      %v1941 = vpop.f32.mrb[0].mxu0
      %1942 = vmatprep.mubr.bf16.mxu0 0
      %1943 = vmatmul.mubr.bf16.gmra.mrb[0].mxu0 %v1732
      %v1944 = vpop.f32.mrb[0].mxu0
      %v1945 = vadd.f32 0.0, %v1944
      %v1946 = vpop.f32.mrb[0].mxu0
      %v1947 = vpop.f32.mrb[0].mxu0
      %v1948 = vadd.f32 0.0, %v1947
      %v1949 = vpop.f32.mrb[0].mxu0
      %1950 = vmatprep.mubr.bf16.mxu0 0
      %1951 = vmatmul.mubr.bf16.gmra.mrb[0].mxu0 %v1733
      %v1952 = vpop.f32.mrb[0].mxu0
      %v1953 = vadd.f32 0.0, %v1952
      %v1954 = vpop.f32.mrb[0].mxu0
      %v1955 = vpop.f32.mrb[0].mxu0
      %v1956 = vadd.f32 0.0, %v1955
      %v1957 = vpop.f32.mrb[0].mxu0
      %1958 = vdwg.mxu0
      %v1975 = vunpack.c.l.b16 %v870
      %v1976 = vunpack.c.l.b16 %v871
      %v1977 = vunpack.c.l.b16 %v872
      %v1978 = vunpack.c.l.b16 %v873
      %v1979 = vunpack.c.l.b16 %v874
      %v1980 = vunpack.c.l.b16 %v875
      %v1981 = vunpack.c.l.b16 %v876
      %v1982 = vunpack.c.l.b16 %v877
      %v1983 = vunpack.c.l.b16 %v878
      %v1984 = vunpack.c.l.b16 %v879
      %v1985 = vunpack.c.l.b16 %v880
      %v1986 = vunpack.c.l.b16 %v881
      %v1987 = vunpack.c.l.b16 %v882
      %v1988 = vunpack.c.l.b16 %v883
      %v1989 = vunpack.c.l.b16 %v884
      %v1990 = vunpack.c.l.b16 %v885
      %v1991 = vpack.c.b16 %v1976, %v1975
      %v1992 = vpack.c.b16 %v1978, %v1977
      %v1993 = vpack.c.b16 %v1980, %v1979
      %v1994 = vpack.c.b16 %v1982, %v1981
      %v1995 = vpack.c.b16 %v1984, %v1983
      %v1996 = vpack.c.b16 %v1986, %v1985
      %v1997 = vpack.c.b16 %v1988, %v1987
      %v1998 = vpack.c.b16 %v1990, %v1989
      %2007 = vmatprep.subr.bf16.mxu0 0
      %2008 = vmatpush1.bf16.msra.mxu0 %v1991
      %2009 = vmatprep.subr.bf16.mxu0 0
      %2010 = vmatpush1.bf16.msra.mxu0 %v1992
      %2011 = vmatprep.subr.bf16.mxu0 0
      %2012 = vmatpush1.bf16.msra.mxu0 %v1993
      %2013 = vmatprep.subr.bf16.mxu0 0
      %2014 = vmatpush1.bf16.msra.mxu0 %v1994
      %2015 = vmatprep.subr.bf16.mxu0 0
      %2016 = vmatpush1.bf16.msra.mxu0 %v1995
      %2017 = vmatprep.subr.bf16.mxu0 0
      %2018 = vmatpush1.bf16.msra.mxu0 %v1996
      %2019 = vmatprep.subr.bf16.mxu0 0
      %2020 = vmatpush1.bf16.msra.mxu0 %v1997
      %2021 = vmatprep.subr.bf16.mxu0 0
      %2022 = vmatpush1.bf16.msra.mxu0 %v1998
      %2023 = vmatprep.subr.bf16.mxu0 0
      %2024 = vmatpush1.bf16.msra.mxu0 0
      %2025 = vmatprep.subr.bf16.mxu0 0
      %2026 = vmatpush1.bf16.msra.mxu0 0
      %2027 = vmatprep.subr.bf16.mxu0 0
      %2028 = vmatpush1.bf16.msra.mxu0 0
      %2029 = vmatprep.subr.bf16.mxu0 0
      %2030 = vmatpush1.bf16.msra.mxu0 0
      %2031 = vmatprep.subr.bf16.mxu0 0
      %2032 = vmatpush1.bf16.msra.mxu0 0
      %2033 = vmatprep.subr.bf16.mxu0 0
      %2034 = vmatpush1.bf16.msra.mxu0 0
      %2035 = vmatprep.subr.bf16.mxu0 0
      %2036 = vmatpush1.bf16.msra.mxu0 0
      %2037 = vmatprep.subr.bf16.mxu0 0
      %2038 = vmatpush1.bf16.msra.mxu0 0
      %2039 = vmatprep.mubr.bf16.mxu0 0
      %2040 = vmatmul.mubr.bf16.gmra.mrb[0].mxu0 %v854
      %v2041 = vpop.f32.mrb[0].mxu0
      %v2042 = vadd.f32 %v1833, %v2041
      %v2043 = vpop.f32.mrb[0].mxu0
      %v2044 = vpop.f32.mrb[0].mxu0
      %v2045 = vadd.f32 %v1836, %v2044
      %v2046 = vpop.f32.mrb[0].mxu0
      %2047 = vmatprep.mubr.bf16.mxu0 0
      %2048 = vmatmul.mubr.bf16.gmra.mrb[0].mxu0 %v855
      %v2049 = vpop.f32.mrb[0].mxu0
      %v2050 = vadd.f32 %v1841, %v2049
      %v2051 = vpop.f32.mrb[0].mxu0
      %v2052 = vpop.f32.mrb[0].mxu0
      %v2053 = vadd.f32 %v1844, %v2052
      %v2054 = vpop.f32.mrb[0].mxu0
      %2055 = vmatprep.mubr.bf16.mxu0 0
      %2056 = vmatmul.mubr.bf16.gmra.mrb[0].mxu0 %v856
      %v2057 = vpop.f32.mrb[0].mxu0
      %v2058 = vadd.f32 %v1849, %v2057
      %v2059 = vpop.f32.mrb[0].mxu0
      %v2060 = vpop.f32.mrb[0].mxu0
      %v2061 = vadd.f32 %v1852, %v2060
      %v2062 = vpop.f32.mrb[0].mxu0
      %2063 = vmatprep.mubr.bf16.mxu0 0
      %2064 = vmatmul.mubr.bf16.gmra.mrb[0].mxu0 %v857
      %v2065 = vpop.f32.mrb[0].mxu0
      %v2066 = vadd.f32 %v1857, %v2065
      %v2067 = vpop.f32.mrb[0].mxu0
      %v2068 = vpop.f32.mrb[0].mxu0
      %v2069 = vadd.f32 %v1860, %v2068
      %v2070 = vpop.f32.mrb[0].mxu0
      %2071 = vmatprep.mubr.bf16.mxu0 0
      %2072 = vmatmul.mubr.bf16.gmra.mrb[0].mxu0 %v858
      %v2073 = vpop.f32.mrb[0].mxu0
      %v2074 = vadd.f32 %v1865, %v2073
      %v2075 = vpop.f32.mrb[0].mxu0
      %v2076 = vpop.f32.mrb[0].mxu0
      %v2077 = vadd.f32 %v1868, %v2076
      %v2078 = vpop.f32.mrb[0].mxu0
      %2079 = vmatprep.mubr.bf16.mxu0 0
      %2080 = vmatmul.mubr.bf16.gmra.mrb[0].mxu0 %v859
      %v2081 = vpop.f32.mrb[0].mxu0
      %v2082 = vadd.f32 %v1873, %v2081
      %v2083 = vpop.f32.mrb[0].mxu0
      %v2084 = vpop.f32.mrb[0].mxu0
      %v2085 = vadd.f32 %v1876, %v2084
      %v2086 = vpop.f32.mrb[0].mxu0
      %2087 = vmatprep.mubr.bf16.mxu0 0
      %2088 = vmatmul.mubr.bf16.gmra.mrb[0].mxu0 %v860
      %v2089 = vpop.f32.mrb[0].mxu0
      %v2090 = vadd.f32 %v1881, %v2089
      %v2091 = vpop.f32.mrb[0].mxu0
      %v2092 = vpop.f32.mrb[0].mxu0
      %v2093 = vadd.f32 %v1884, %v2092
      %v2094 = vpop.f32.mrb[0].mxu0
      %2095 = vmatprep.mubr.bf16.mxu0 0
      %2096 = vmatmul.mubr.bf16.gmra.mrb[0].mxu0 %v861
      %v2097 = vpop.f32.mrb[0].mxu0
      %v2098 = vadd.f32 %v1889, %v2097
      %v2099 = vpop.f32.mrb[0].mxu0
      %v2100 = vpop.f32.mrb[0].mxu0
      %v2101 = vadd.f32 %v1892, %v2100
      %v2102 = vpop.f32.mrb[0].mxu0
      %2103 = vmatprep.mubr.bf16.mxu0 0
      %2104 = vmatmul.mubr.bf16.gmra.mrb[0].mxu0 %v862
      %v2105 = vpop.f32.mrb[0].mxu0
      %v2106 = vadd.f32 %v1897, %v2105
      %v2107 = vpop.f32.mrb[0].mxu0
      %v2108 = vpop.f32.mrb[0].mxu0
      %v2109 = vadd.f32 %v1900, %v2108
      %v2110 = vpop.f32.mrb[0].mxu0
      %2111 = vmatprep.mubr.bf16.mxu0 0
      %2112 = vmatmul.mubr.bf16.gmra.mrb[0].mxu0 %v863
      %v2113 = vpop.f32.mrb[0].mxu0
      %v2114 = vadd.f32 %v1905, %v2113
      %v2115 = vpop.f32.mrb[0].mxu0
      %v2116 = vpop.f32.mrb[0].mxu0
      %v2117 = vadd.f32 %v1908, %v2116
      %v2118 = vpop.f32.mrb[0].mxu0
      %2119 = vmatprep.mubr.bf16.mxu0 0
      %2120 = vmatmul.mubr.bf16.gmra.mrb[0].mxu0 %v864
      %v2121 = vpop.f32.mrb[0].mxu0
      %v2122 = vadd.f32 %v1913, %v2121
      %v2123 = vpop.f32.mrb[0].mxu0
      %v2124 = vpop.f32.mrb[0].mxu0
      %v2125 = vadd.f32 %v1916, %v2124
      %v2126 = vpop.f32.mrb[0].mxu0
      %2127 = vmatprep.mubr.bf16.mxu0 0
      %2128 = vmatmul.mubr.bf16.gmra.mrb[0].mxu0 %v865
      %v2129 = vpop.f32.mrb[0].mxu0
      %v2130 = vadd.f32 %v1921, %v2129
      %v2131 = vpop.f32.mrb[0].mxu0
      %v2132 = vpop.f32.mrb[0].mxu0
      %v2133 = vadd.f32 %v1924, %v2132
      %v2134 = vpop.f32.mrb[0].mxu0
      %2135 = vmatprep.mubr.bf16.mxu0 0
      %2136 = vmatmul.mubr.bf16.gmra.mrb[0].mxu0 %v866
      %v2137 = vpop.f32.mrb[0].mxu0
      %v2138 = vadd.f32 %v1929, %v2137
      %v2139 = vpop.f32.mrb[0].mxu0
      %v2140 = vpop.f32.mrb[0].mxu0
      %v2141 = vadd.f32 %v1932, %v2140
      %v2142 = vpop.f32.mrb[0].mxu0
      %2143 = vmatprep.mubr.bf16.mxu0 0
      %2144 = vmatmul.mubr.bf16.gmra.mrb[0].mxu0 %v867
      %v2145 = vpop.f32.mrb[0].mxu0
      %v2146 = vadd.f32 %v1937, %v2145
      %v2147 = vpop.f32.mrb[0].mxu0
      %v2148 = vpop.f32.mrb[0].mxu0
      %v2149 = vadd.f32 %v1940, %v2148
      %v2150 = vpop.f32.mrb[0].mxu0
      %2151 = vmatprep.mubr.bf16.mxu0 0
      %2152 = vmatmul.mubr.bf16.gmra.mrb[0].mxu0 %v868
      %v2153 = vpop.f32.mrb[0].mxu0
      %v2154 = vadd.f32 %v1945, %v2153
      %v2155 = vpop.f32.mrb[0].mxu0
      %v2156 = vpop.f32.mrb[0].mxu0
      %v2157 = vadd.f32 %v1948, %v2156
      %v2158 = vpop.f32.mrb[0].mxu0
      %2159 = vmatprep.mubr.bf16.mxu0 0
      %2160 = vmatmul.mubr.bf16.gmra.mrb[0].mxu0 %v869
      %v2161 = vpop.f32.mrb[0].mxu0
      %v2162 = vadd.f32 %v1953, %v2161
      %v2163 = vpop.f32.mrb[0].mxu0
      %v2164 = vpop.f32.mrb[0].mxu0
      %v2165 = vadd.f32 %v1956, %v2164
      %v2166 = vpop.f32.mrb[0].mxu0
      %2167 = vdwg.mxu0
      %vm2168 = vcmask 261120
      %2169 = vst.msk [vmem:[%s145] sm:$0xff] %vm2168, %v2042
      %2170 = vst.msk [vmem:[%s145 + $0x8] sm:$0xff] %vm2168, %v2045
      %2171 = vst.msk [vmem:[%s145 + $0x10] sm:$0xff] %vm2168, %v2050
      %2172 = vst.msk [vmem:[%s145 + $0x18] sm:$0xff] %vm2168, %v2053
      %2173 = vst.msk [vmem:[%s145 + $0x20] sm:$0xff] %vm2168, %v2058
      %2174 = vst.msk [vmem:[%s145 + $0x28] sm:$0xff] %vm2168, %v2061
      %2175 = vst.msk [vmem:[%s145 + $0x30] sm:$0xff] %vm2168, %v2066
      %2176 = vst.msk [vmem:[%s145 + $0x38] sm:$0xff] %vm2168, %v2069
      %2177 = vst.msk [vmem:[%s145 + $0x40] sm:$0xff] %vm2168, %v2074
      %2178 = vst.msk [vmem:[%s145 + $0x48] sm:$0xff] %vm2168, %v2077
      %2179 = vst.msk [vmem:[%s145 + $0x50] sm:$0xff] %vm2168, %v2082
      %2180 = vst.msk [vmem:[%s145 + $0x58] sm:$0xff] %vm2168, %v2085
      %2181 = vst.msk [vmem:[%s145 + $0x60] sm:$0xff] %vm2168, %v2090
      %2182 = vst.msk [vmem:[%s145 + $0x68] sm:$0xff] %vm2168, %v2093
      %2183 = vst.msk [vmem:[%s145 + $0x70] sm:$0xff] %vm2168, %v2098
      %2184 = vst.msk [vmem:[%s145 + $0x78] sm:$0xff] %vm2168, %v2101
      %2185 = vst.msk [vmem:[%s145 + $0x80] sm:$0xff] %vm2168, %v2106
      %2186 = vst.msk [vmem:[%s145 + $0x88] sm:$0xff] %vm2168, %v2109
      %2187 = vst.msk [vmem:[%s145 + $0x90] sm:$0xff] %vm2168, %v2114
      %2188 = vst.msk [vmem:[%s145 + $0x98] sm:$0xff] %vm2168, %v2117
      %2189 = vst.msk [vmem:[%s145 + $0xa0] sm:$0xff] %vm2168, %v2122
      %2190 = vst.msk [vmem:[%s145 + $0xa8] sm:$0xff] %vm2168, %v2125
      %2191 = vst.msk [vmem:[%s145 + $0xb0] sm:$0xff] %vm2168, %v2130
      %2192 = vst.msk [vmem:[%s145 + $0xb8] sm:$0xff] %vm2168, %v2133
      %2193 = vst.msk [vmem:[%s145 + $0xc0] sm:$0xff] %vm2168, %v2138
      %2194 = vst.msk [vmem:[%s145 + $0xc8] sm:$0xff] %vm2168, %v2141
      %2195 = vst.msk [vmem:[%s145 + $0xd0] sm:$0xff] %vm2168, %v2146
      %2196 = vst.msk [vmem:[%s145 + $0xd8] sm:$0xff] %vm2168, %v2149
      %2197 = vst.msk [vmem:[%s145 + $0xe0] sm:$0xff] %vm2168, %v2154
      %2198 = vst.msk [vmem:[%s145 + $0xe8] sm:$0xff] %vm2168, %v2157
      %2199 = vst.msk [vmem:[%s145 + $0xf0] sm:$0xff] %vm2168, %v2162
      %2200 = vst.msk [vmem:[%s145 + $0xf8] sm:$0xff] %vm2168, %v2165
      %s2201 = smul.u32 32, %s13
      %p2202 = scmp.lt.s32.totalorder %s2201, 63
      %s2203 = scalar_select %p2202, %s2201, 63
      %s2204 = smul.addr %s2203, 8
      %s2205 = scalar_lea.vmem %s2, %s2204
      // Predicated region
      $region29: #{tpu_custom_call.1} parent=27 // pred_check
        %p2206 = pneg %p78
      $region30: #{tpu_custom_call.1} parent=27 // pred_check_branch
        %2208 = sbr.rel (%p2206) target = $region32
      $region31: #{tpu_custom_call.1} parent=27 // pred_region
        %s2209 = smul.u32 32, %s13
      $region32: #{tpu_custom_call.1} parent=27 // pred_fallthru
        _
    $region28: #{tpu_custom_call.1} parent=5 // pred_fallthru
      _
    %p2210 = scmp.le.s32.totalorder 2, %s8
    // Predicated region
    $region33: #{tpu_custom_call.1} parent=5 // pred_check
      %p2211 = pneg %p2210
    $region34: #{tpu_custom_call.1} parent=5 // pred_check_branch
      %2213 = sbr.rel (%p2211) target = $region36
    $region35: #{tpu_custom_call.1} parent=5 // pred_region
      %s2214 = ssub.s32 %s8, 2
      // Predicated region
      $region37: #{tpu_custom_call.1} parent=35 // pred_check
        %p2215 = pneg %p84
      $region38: #{tpu_custom_call.1} parent=35 // pred_check_branch
        %2217 = sbr.rel (%p2215) target = $region40
      $region39: #{tpu_custom_call.1} parent=35 // pred_region
        %s2218 = smul.u32 32, %s14
        %p2219 = scmp.lt.s32.totalorder %s2218, 63
        %s2220 = scalar_select %p2219, %s2218, 63
        %s2221 = smul.addr %s2220, 8
        %s2222 = scalar_lea.vmem %s2, %s2221
      $region40: #{tpu_custom_call.1} parent=35 // pred_fallthru
        _
    $region36: #{tpu_custom_call.1} parent=5 // pred_fallthru
      _
  $region6: #{tpu_custom_call.1} parent=0 // loop_footer
    %s12 = sadd.s32 1, %s8
  $region7: #{tpu_custom_call.1} parent=0 // loop_footer_branch
    %7 = sbr.rel target = $region3
  $region8: #{tpu_custom_call.1} parent=0 // loop_exit
    _

</llo_original>
